<compile_context>
chip_gen: v6e
topology: v6e:2x2x1
jax: 0.10.0
libtpu: 0.0.40
codegen_flags: <defaults>
</compile_context>

<pallas_src>
import jax
import jax.numpy as jnp
from jax.experimental import pallas as pl
from jax.experimental.pallas import tpu as pltpu


def _round_up(n, m):
    return ((n + m - 1) // m) * m


def _crossnet_kernel(num_layers):
    def kernel(x_ref, vt_ref, wt_ref, b_ref, o_ref):
        x_in = x_ref[...]                         # (TB, Fp), native dtype
        x0 = x_in.astype(jnp.float32)             # f32 state for elementwise path
        xl = x0
        mm_dtype = jnp.dtype(vt_ref.dtype)
        keep_f32 = mm_dtype == jnp.dtype(jnp.float32)
        for layer in range(num_layers):           # L is small -> static unroll
            Vt = vt_ref[layer]                    # (Fp, Rp), pre-transposed
            Wt = wt_ref[layer]                    # (Rp, Fp), pre-transposed
            bias = b_ref[layer].astype(jnp.float32)   # (1, Fp)
            xl_mm = xl if keep_f32 else xl.astype(mm_dtype)
            # x_l_v = x_l @ V^T   -> (TB, Rp)   (Rp zero-padded, result identical)
            xv = jnp.dot(xl_mm, Vt, preferred_element_type=jnp.float32)
            xv_mm = xv if keep_f32 else xv.astype(mm_dtype)
            # x_l_w = x_l_v @ W^T + b   -> (TB, Fp)
            xw = jnp.dot(xv_mm, Wt, preferred_element_type=jnp.float32) + bias
            # x_l = x_0 * x_l_w + x_l   (f32 elementwise; v5e has no bf16 VPU)
            xl = x0 * xw + xl
        o_ref[...] = xl.astype(o_ref.dtype)       # single cast at the store
    return kernel


def _vmem_capacity_bytes():
    try:
        cap = int(pltpu.get_tpu_info().vmem_capacity_bytes)
        if cap > 0:
            return cap
    except Exception:
        pass
    return 64 << 20  # conservative default (v7x per-TC VMEM)


def _pick_tile(B8, Fp, x_itemsize, resident_bytes, usable_bytes):
    """Largest batch tile that fits VMEM, traded off against ragged padding."""
    def fits(t):
        io = 4 * t * Fp * x_itemsize            # in + out tiles, double-buffered
        tmp = 4 * t * Fp * 4 + t * 128 * 4      # f32 x0/xl/xw + (t, Rp) intermediate
        return resident_bytes + io + tmp + (2 << 20) <= usable_bytes

    # Per-grid-step fixed overhead (~0.35us) expressed in "row-equivalents" of
    # HBM streaming (in + out bytes per row) at ~1 TB/s (conservative).
    bytes_per_row = max(2 * Fp * x_itemsize, 1)
    overhead_rows = max(64, min(4096, 350_000 // bytes_per_row))

    cands = sorted(
        {t for t in (4096, 2048, 1024, 512, 256, 128, 64, 32, 16, 8, B8)
         if t <= B8 and t % 8 == 0 and fits(t)},
        reverse=True,
    )
    if not cands:
        return 8
    best_t, best_cost = None, None
    for t in cands:
        pad = _round_up(B8, t)
        steps = pad // t
        cost = steps * overhead_rows + pad
        if best_cost is None or cost < best_cost:
            best_t, best_cost = t, cost
    return best_t


def low_rank_crossnet(x, V, W, b):
    """x: [B, F]; V: [L, R, F]; W: [L, F, R]; b: [L, F]."""
    B, F = x.shape
    L, R, Fv = V.shape
    assert Fv == F and W.shape == (L, F, R) and b.shape == (L, F)

    Fp = _round_up(F, 128)                 # lane-dense output / matmul N dim
    Rp = _round_up(max(R, 128), 128)       # lane/K-dense low-rank dim
    B8 = _round_up(B, 8)

    x_itemsize = jnp.dtype(x.dtype).itemsize
    p_itemsize = jnp.dtype(V.dtype).itemsize

    # Resident parameter VMEM footprint (counted double-buffered to stay safe even
    # if single-buffering is unavailable); bias (L,1,Fp) sublane-pads 1 -> 8.
    resident = 2 * (L * Fp * Rp * p_itemsize        # Vt
                    + L * Rp * Fp * p_itemsize      # Wt
                    + L * 8 * Fp * p_itemsize)      # bias (sublane-padded)

    cap = _vmem_capacity_bytes()
    usable = int(cap * 0.85)

    tile = _pick_tile(B8, Fp, x_itemsize, resident, usable)
    B_pad = _round_up(B8, tile)

    # v7x megacore: ensure >= 2 grid steps when possible so both TensorCores work.
    if B_pad // tile == 1 and B_pad >= 16:
        tile = _round_up(B_pad // 2, 8)
        B_pad = 2 * tile

    # One-time input / parameter prep in the wrapper (cheap XLA ops, done once):
    x_in = x
    if (B_pad, Fp) != (B, F):
        x_in = jnp.pad(x, ((0, B_pad - B), (0, Fp - F)))
    Vt = jnp.swapaxes(V, 1, 2)                                   # [L, F, R]
    Wt = jnp.swapaxes(W, 1, 2)                                   # [L, R, F]
    Vt = jnp.pad(Vt, ((0, 0), (0, Fp - F), (0, Rp - R)))         # [L, Fp, Rp]
    Wt = jnp.pad(Wt, ((0, 0), (0, Rp - R), (0, Fp - F)))         # [L, Rp, Fp]
    b3 = jnp.pad(b, ((0, 0), (0, Fp - F))).reshape(L, 1, Fp)     # [L, 1, Fp]

    # Explicit VMEM budget: resident params + double-buffered x/out tiles + f32
    # temporaries + headroom, capped per-chip (never a fixed cross-chip clamp).
    io = 4 * tile * Fp * x_itemsize
    tmp = 4 * tile * Fp * 4 + tile * 128 * 4
    need = resident + io + tmp + (4 << 20)
    vmem_limit = int(min(max(need, 16 << 20), int(cap * 0.9)))

    grid = (B_pad // tile,)

    def _call(single_buffer_params):
        pmode = {}
        if single_buffer_params:
            # Constant-index params: one buffer is enough, frees VMEM for the tile.
            pmode = dict(pipeline_mode=pl.Buffered(1))
        grid_spec = pltpu.PrefetchScalarGridSpec(
            num_scalar_prefetch=0,
            grid=grid,
            in_specs=[
                pl.BlockSpec((tile, Fp), lambda i: (i, 0)),              # x (streamed)
                pl.BlockSpec((L, Fp, Rp), lambda i: (0, 0, 0), **pmode),  # V^T (resident)
                pl.BlockSpec((L, Rp, Fp), lambda i: (0, 0, 0), **pmode),  # W^T (resident)
                pl.BlockSpec((L, 1, Fp), lambda i: (0, 0, 0), **pmode),   # bias (resident)
            ],
            out_specs=pl.BlockSpec((tile, Fp), lambda i: (i, 0)),
        )
        return pl.pallas_call(
            _crossnet_kernel(L),
            out_shape=jax.ShapeDtypeStruct((B_pad, Fp), x.dtype),
            grid_spec=grid_spec,
            compiler_params=pltpu.CompilerParams(
                dimension_semantics=("parallel",),
                vmem_limit_bytes=vmem_limit,
            ),
        )(x_in, Vt, Wt, b3)

    try:
        out = _call(True)
    except Exception:
        # pipeline_mode / Buffered(1) not supported on this JAX version: fall back
        # to default double-buffering of the constant-index parameter inputs.
        out = _call(False)

    if (B_pad, Fp) != (B, F):
        out = out[:B, :F]
    return out


def low_rank_crossnet_ref(x, V, W, b):
    x0 = x.astype(jnp.float32)
    xl = x0
    for layer in range(V.shape[0]):
        xv = xl @ V[layer].T.astype(jnp.float32)
        xw = xv @ W[layer].T.astype(jnp.float32) + b[layer].astype(jnp.float32)
        xl = x0 * xw + xl
    return xl.astype(x.dtype)


if __name__ == "__main__":
    # Small, deterministic synthetic config consistent with the module:
    batch = 16
    in_features = 128
    low_rank = 16
    num_layers = 3

    key = jax.random.PRNGKey(0)
    kx, kv, kw, kb = jax.random.split(key, 4)

    x = jax.random.normal(kx, (batch, in_features), dtype=jnp.float32)
    V = jax.random.normal(kv, (num_layers, low_rank, in_features),
                          dtype=jnp.float32) * 0.1
    W = jax.random.normal(kw, (num_layers, in_features, low_rank),
                          dtype=jnp.float32) * 0.1
    b = jax.random.normal(kb, (num_layers, in_features), dtype=jnp.float32) * 0.1

    out = jax.block_until_ready(low_rank_crossnet(x, V, W, b))
    ref = low_rank_crossnet_ref(x, V, W, b)
    assert out.shape == (batch, in_features)
    assert jnp.allclose(out, ref, atol=1e-4, rtol=1e-4)

    # Ragged batch AND non-128-multiple feature dim (exercise both padding paths).
    F2 = 96
    kx2, kv2, kw2, kb2 = jax.random.split(jax.random.PRNGKey(1), 4)
    x2 = jax.random.normal(kx2, (batch + 3, F2), dtype=jnp.float32)
    V2 = jax.random.normal(kv2, (num_layers, low_rank, F2), dtype=jnp.float32) * 0.1
    W2 = jax.random.normal(kw2, (num_layers, F2, low_rank), dtype=jnp.float32) * 0.1
    b2 = jax.random.normal(kb2, (num_layers, F2), dtype=jnp.float32) * 0.1
    out2 = jax.block_until_ready(low_rank_crossnet(x2, V2, W2, b2))
    ref2 = low_rank_crossnet_ref(x2, V2, W2, b2)
    assert out2.shape == (batch + 3, F2)
    assert jnp.allclose(out2, ref2, atol=1e-4, rtol=1e-4)

    print("KERNEL_OK")
</pallas_src>

<mosaic_0001>
module attributes {stable_mosaic.version = 11 : i64} {
  func.func @kernel(%arg0: i32, %arg1: memref<8x128xf32, #tpu.memory_space<vmem>>, %arg2: memref<3x128x128xf32, #tpu.memory_space<vmem>>, %arg3: memref<3x128x128xf32, #tpu.memory_space<vmem>>, %arg4: memref<3x1x128xf32, #tpu.memory_space<vmem>>, %arg5: memref<8x128xf32, #tpu.memory_space<vmem>>) attributes {dimension_semantics = [#tpu.dimension_semantics<parallel>], iteration_bounds = array<i64: 2>, scalar_prefetch = 0 : i64, scratch_operands = 0 : i64, tpu.core_type = #tpu.core_type<tc>, window_params = [{transform_indices = @transform_0, window_bounds = array<i64: 8, 128>}, {pipeline_mode = #tpu.pipeline_mode<synchronous>, transform_indices = @transform_1, window_bounds = array<i64: 3, 128, 128>}, {pipeline_mode = #tpu.pipeline_mode<synchronous>, transform_indices = @transform_2, window_bounds = array<i64: 3, 128, 128>}, {pipeline_mode = #tpu.pipeline_mode<synchronous>, transform_indices = @transform_3, window_bounds = array<i64: 3, 1, 128>}, {transform_indices = @transform_4, window_bounds = array<i64: 8, 128>}]} {
    %c0 = arith.constant 0 : index
    %c0_0 = arith.constant 0 : index
    %0 = vector.load %arg1[%c0, %c0_0] : memref<8x128xf32, #tpu.memory_space<vmem>>, vector<8x128xf32>
    %c0_1 = arith.constant 0 : index
    %c0_2 = arith.constant 0 : index
    %c0_3 = arith.constant 0 : index
    %1 = vector.load %arg2[%c0_1, %c0_2, %c0_3] : memref<3x128x128xf32, #tpu.memory_space<vmem>>, vector<1x128x128xf32>
    %2 = vector.shape_cast %1 : vector<1x128x128xf32> to vector<128x128xf32>
    %c0_4 = arith.constant 0 : index
    %c0_5 = arith.constant 0 : index
    %c0_6 = arith.constant 0 : index
    %3 = vector.load %arg3[%c0_4, %c0_5, %c0_6] : memref<3x128x128xf32, #tpu.memory_space<vmem>>, vector<1x128x128xf32>
    %4 = vector.shape_cast %3 : vector<1x128x128xf32> to vector<128x128xf32>
    %c0_7 = arith.constant 0 : index
    %c0_8 = arith.constant 0 : index
    %c0_9 = arith.constant 0 : index
    %5 = vector.load %arg4[%c0_7, %c0_8, %c0_9] : memref<3x1x128xf32, #tpu.memory_space<vmem>>, vector<1x1x128xf32>
    %6 = vector.shape_cast %5 : vector<1x1x128xf32> to vector<1x128xf32>
    %cst = arith.constant dense<0.000000e+00> : vector<8x128xf32>
    %7 = tpu.matmul %0, %2, %cst {dimension_numbers = #tpu.dot_dimension_numbers<[1], [0], [0], [1], [0, 0, 1, 1], [], []>} : vector<8x128xf32>, vector<128x128xf32>, vector<8x128xf32> -> vector<8x128xf32>
    %cst_10 = arith.constant dense<0.000000e+00> : vector<8x128xf32>
    %8 = tpu.matmul %7, %4, %cst_10 {dimension_numbers = #tpu.dot_dimension_numbers<[1], [0], [0], [1], [0, 0, 1, 1], [], []>} : vector<8x128xf32>, vector<128x128xf32>, vector<8x128xf32> -> vector<8x128xf32>
    %9 = vector.broadcast %6 : vector<1x128xf32> to vector<8x128xf32>
    %10 = arith.addf %8, %9 : vector<8x128xf32>
    %11 = arith.mulf %0, %10 : vector<8x128xf32>
    %12 = arith.addf %11, %0 : vector<8x128xf32>
    %c1 = arith.constant 1 : index
    %c0_11 = arith.constant 0 : index
    %c0_12 = arith.constant 0 : index
    %13 = vector.load %arg2[%c1, %c0_11, %c0_12] : memref<3x128x128xf32, #tpu.memory_space<vmem>>, vector<1x128x128xf32>
    %14 = vector.shape_cast %13 : vector<1x128x128xf32> to vector<128x128xf32>
    %c1_13 = arith.constant 1 : index
    %c0_14 = arith.constant 0 : index
    %c0_15 = arith.constant 0 : index
    %15 = vector.load %arg3[%c1_13, %c0_14, %c0_15] : memref<3x128x128xf32, #tpu.memory_space<vmem>>, vector<1x128x128xf32>
    %16 = vector.shape_cast %15 : vector<1x128x128xf32> to vector<128x128xf32>
    %c1_16 = arith.constant 1 : index
    %c0_17 = arith.constant 0 : index
    %c0_18 = arith.constant 0 : index
    %17 = vector.load %arg4[%c1_16, %c0_17, %c0_18] : memref<3x1x128xf32, #tpu.memory_space<vmem>>, vector<1x1x128xf32>
    %18 = vector.shape_cast %17 : vector<1x1x128xf32> to vector<1x128xf32>
    %cst_19 = arith.constant dense<0.000000e+00> : vector<8x128xf32>
    %19 = tpu.matmul %12, %14, %cst_19 {dimension_numbers = #tpu.dot_dimension_numbers<[1], [0], [0], [1], [0, 0, 1, 1], [], []>} : vector<8x128xf32>, vector<128x128xf32>, vector<8x128xf32> -> vector<8x128xf32>
    %cst_20 = arith.constant dense<0.000000e+00> : vector<8x128xf32>
    %20 = tpu.matmul %19, %16, %cst_20 {dimension_numbers = #tpu.dot_dimension_numbers<[1], [0], [0], [1], [0, 0, 1, 1], [], []>} : vector<8x128xf32>, vector<128x128xf32>, vector<8x128xf32> -> vector<8x128xf32>
    %21 = vector.broadcast %18 : vector<1x128xf32> to vector<8x128xf32>
    %22 = arith.addf %20, %21 : vector<8x128xf32>
    %23 = arith.mulf %0, %22 : vector<8x128xf32>
    %24 = arith.addf %23, %12 : vector<8x128xf32>
    %c2 = arith.constant 2 : index
    %c0_21 = arith.constant 0 : index
    %c0_22 = arith.constant 0 : index
    %25 = vector.load %arg2[%c2, %c0_21, %c0_22] : memref<3x128x128xf32, #tpu.memory_space<vmem>>, vector<1x128x128xf32>
    %26 = vector.shape_cast %25 : vector<1x128x128xf32> to vector<128x128xf32>
    %c2_23 = arith.constant 2 : index
    %c0_24 = arith.constant 0 : index
    %c0_25 = arith.constant 0 : index
    %27 = vector.load %arg3[%c2_23, %c0_24, %c0_25] : memref<3x128x128xf32, #tpu.memory_space<vmem>>, vector<1x128x128xf32>
    %28 = vector.shape_cast %27 : vector<1x128x128xf32> to vector<128x128xf32>
    %c2_26 = arith.constant 2 : index
    %c0_27 = arith.constant 0 : index
    %c0_28 = arith.constant 0 : index
    %29 = vector.load %arg4[%c2_26, %c0_27, %c0_28] : memref<3x1x128xf32, #tpu.memory_space<vmem>>, vector<1x1x128xf32>
    %30 = vector.shape_cast %29 : vector<1x1x128xf32> to vector<1x128xf32>
    %cst_29 = arith.constant dense<0.000000e+00> : vector<8x128xf32>
    %31 = tpu.matmul %24, %26, %cst_29 {dimension_numbers = #tpu.dot_dimension_numbers<[1], [0], [0], [1], [0, 0, 1, 1], [], []>} : vector<8x128xf32>, vector<128x128xf32>, vector<8x128xf32> -> vector<8x128xf32>
    %cst_30 = arith.constant dense<0.000000e+00> : vector<8x128xf32>
    %32 = tpu.matmul %31, %28, %cst_30 {dimension_numbers = #tpu.dot_dimension_numbers<[1], [0], [0], [1], [0, 0, 1, 1], [], []>} : vector<8x128xf32>, vector<128x128xf32>, vector<8x128xf32> -> vector<8x128xf32>
    %33 = vector.broadcast %30 : vector<1x128xf32> to vector<8x128xf32>
    %34 = arith.addf %32, %33 : vector<8x128xf32>
    %35 = arith.mulf %0, %34 : vector<8x128xf32>
    %36 = arith.addf %35, %24 : vector<8x128xf32>
    %c0_31 = arith.constant 0 : index
    %c0_32 = arith.constant 0 : index
    %37 = vector.load %arg5[%c0_31, %c0_32] : memref<8x128xf32, #tpu.memory_space<vmem>>, vector<8x128xf32>
    tpu.vector_store %arg5[%c0_31, %c0_32], %36 {strides = array<i32>} : memref<8x128xf32, #tpu.memory_space<vmem>>, vector<8x128xf32>,
    return
  }
  func.func @transform_0(%arg0: i32) -> (i32, i32) {
    %c0_i32 = arith.constant 0 : i32
    %c0_i32_0 = arith.constant 0 : i32
    return %arg0, %c0_i32 : i32, i32
  }
  func.func @transform_1(%arg0: i32) -> (i32, i32, i32) {
    %c0_i32 = arith.constant 0 : i32
    %c0_i32_0 = arith.constant 0 : i32
    %c0_i32_1 = arith.constant 0 : i32
    %c0_i32_2 = arith.constant 0 : i32
    return %c0_i32, %c0_i32_0, %c0_i32_1 : i32, i32, i32
  }
  func.func @transform_2(%arg0: i32) -> (i32, i32, i32) {
    %c0_i32 = arith.constant 0 : i32
    %c0_i32_0 = arith.constant 0 : i32
    %c0_i32_1 = arith.constant 0 : i32
    %c0_i32_2 = arith.constant 0 : i32
    return %c0_i32, %c0_i32_0, %c0_i32_1 : i32, i32, i32
  }
  func.func @transform_3(%arg0: i32) -> (i32, i32, i32) {
    %c0_i32 = arith.constant 0 : i32
    %c0_i32_0 = arith.constant 0 : i32
    %c0_i32_1 = arith.constant 0 : i32
    %c0_i32_2 = arith.constant 0 : i32
    return %c0_i32, %c0_i32_0, %c0_i32_1 : i32, i32, i32
  }
  func.func @transform_4(%arg0: i32) -> (i32, i32) {
    %c0_i32 = arith.constant 0 : i32
    %c0_i32_0 = arith.constant 0 : i32
    return %arg0, %c0_i32 : i32, i32
  }
}

module attributes {stable_mosaic.version = 11 : i64} {
  func.func @kernel(%arg0: i32, %arg1: memref<8x128xf32, #tpu.memory_space<vmem>>, %arg2: memref<3x128x128xf32, #tpu.memory_space<vmem>>, %arg3: memref<3x128x128xf32, #tpu.memory_space<vmem>>, %arg4: memref<3x1x128xf32, #tpu.memory_space<vmem>>, %arg5: memref<8x128xf32, #tpu.memory_space<vmem>>) attributes {dimension_semantics = [#tpu.dimension_semantics<parallel>], iteration_bounds = array<i64: 2>, scalar_prefetch = 0 : i64, scratch_operands = 0 : i64, tpu.core_type = #tpu.core_type<tc>, window_params = [{transform_indices = @transform_0, window_bounds = array<i64: 8, 128>}, {pipeline_mode = #tpu.pipeline_mode<synchronous>, transform_indices = @transform_1, window_bounds = array<i64: 3, 128, 128>}, {pipeline_mode = #tpu.pipeline_mode<synchronous>, transform_indices = @transform_2, window_bounds = array<i64: 3, 128, 128>}, {pipeline_mode = #tpu.pipeline_mode<synchronous>, transform_indices = @transform_3, window_bounds = array<i64: 3, 1, 128>}, {transform_indices = @transform_4, window_bounds = array<i64: 8, 128>}]} {
    %c0 = arith.constant 0 : index
    %c0_0 = arith.constant 0 : index
    %0 = vector.load %arg1[%c0, %c0_0] : memref<8x128xf32, #tpu.memory_space<vmem>>, vector<8x128xf32>
    %c0_1 = arith.constant 0 : index
    %c0_2 = arith.constant 0 : index
    %c0_3 = arith.constant 0 : index
    %1 = vector.load %arg2[%c0_1, %c0_2, %c0_3] : memref<3x128x128xf32, #tpu.memory_space<vmem>>, vector<1x128x128xf32>
    %2 = vector.shape_cast %1 : vector<1x128x128xf32> to vector<128x128xf32>
    %c0_4 = arith.constant 0 : index
    %c0_5 = arith.constant 0 : index
    %c0_6 = arith.constant 0 : index
    %3 = vector.load %arg3[%c0_4, %c0_5, %c0_6] : memref<3x128x128xf32, #tpu.memory_space<vmem>>, vector<1x128x128xf32>
    %4 = vector.shape_cast %3 : vector<1x128x128xf32> to vector<128x128xf32>
    %c0_7 = arith.constant 0 : index
    %c0_8 = arith.constant 0 : index
    %c0_9 = arith.constant 0 : index
    %5 = vector.load %arg4[%c0_7, %c0_8, %c0_9] : memref<3x1x128xf32, #tpu.memory_space<vmem>>, vector<1x1x128xf32>
    %6 = vector.shape_cast %5 : vector<1x1x128xf32> to vector<1x128xf32>
    %cst = arith.constant dense<0.000000e+00> : vector<8x128xf32>
    %7 = tpu.matmul %0, %2, %cst {dimension_numbers = #tpu.dot_dimension_numbers<[1], [0], [0], [1], [0, 0, 1, 1], [], []>} : vector<8x128xf32>, vector<128x128xf32>, vector<8x128xf32> -> vector<8x128xf32>
    %cst_10 = arith.constant dense<0.000000e+00> : vector<8x128xf32>
    %8 = tpu.matmul %7, %4, %cst_10 {dimension_numbers = #tpu.dot_dimension_numbers<[1], [0], [0], [1], [0, 0, 1, 1], [], []>} : vector<8x128xf32>, vector<128x128xf32>, vector<8x128xf32> -> vector<8x128xf32>
    %9 = vector.broadcast %6 : vector<1x128xf32> to vector<8x128xf32>
    %10 = arith.addf %8, %9 : vector<8x128xf32>
    %11 = arith.mulf %0, %10 : vector<8x128xf32>
    %12 = arith.addf %11, %0 : vector<8x128xf32>
    %c1 = arith.constant 1 : index
    %c0_11 = arith.constant 0 : index
    %c0_12 = arith.constant 0 : index
    %13 = vector.load %arg2[%c1, %c0_11, %c0_12] : memref<3x128x128xf32, #tpu.memory_space<vmem>>, vector<1x128x128xf32>
    %14 = vector.shape_cast %13 : vector<1x128x128xf32> to vector<128x128xf32>
    %c1_13 = arith.constant 1 : index
    %c0_14 = arith.constant 0 : index
    %c0_15 = arith.constant 0 : index
    %15 = vector.load %arg3[%c1_13, %c0_14, %c0_15] : memref<3x128x128xf32, #tpu.memory_space<vmem>>, vector<1x128x128xf32>
    %16 = vector.shape_cast %15 : vector<1x128x128xf32> to vector<128x128xf32>
    %c1_16 = arith.constant 1 : index
    %c0_17 = arith.constant 0 : index
    %c0_18 = arith.constant 0 : index
    %17 = vector.load %arg4[%c1_16, %c0_17, %c0_18] : memref<3x1x128xf32, #tpu.memory_space<vmem>>, vector<1x1x128xf32>
    %18 = vector.shape_cast %17 : vector<1x1x128xf32> to vector<1x128xf32>
    %cst_19 = arith.constant dense<0.000000e+00> : vector<8x128xf32>
    %19 = tpu.matmul %12, %14, %cst_19 {dimension_numbers = #tpu.dot_dimension_numbers<[1], [0], [0], [1], [0, 0, 1, 1], [], []>} : vector<8x128xf32>, vector<128x128xf32>, vector<8x128xf32> -> vector<8x128xf32>
    %cst_20 = arith.constant dense<0.000000e+00> : vector<8x128xf32>
    %20 = tpu.matmul %19, %16, %cst_20 {dimension_numbers = #tpu.dot_dimension_numbers<[1], [0], [0], [1], [0, 0, 1, 1], [], []>} : vector<8x128xf32>, vector<128x128xf32>, vector<8x128xf32> -> vector<8x128xf32>
    %21 = vector.broadcast %18 : vector<1x128xf32> to vector<8x128xf32>
    %22 = arith.addf %20, %21 : vector<8x128xf32>
    %23 = arith.mulf %0, %22 : vector<8x128xf32>
    %24 = arith.addf %23, %12 : vector<8x128xf32>
    %c2 = arith.constant 2 : index
    %c0_21 = arith.constant 0 : index
    %c0_22 = arith.constant 0 : index
    %25 = vector.load %arg2[%c2, %c0_21, %c0_22] : memref<3x128x128xf32, #tpu.memory_space<vmem>>, vector<1x128x128xf32>
    %26 = vector.shape_cast %25 : vector<1x128x128xf32> to vector<128x128xf32>
    %c2_23 = arith.constant 2 : index
    %c0_24 = arith.constant 0 : index
    %c0_25 = arith.constant 0 : index
    %27 = vector.load %arg3[%c2_23, %c0_24, %c0_25] : memref<3x128x128xf32, #tpu.memory_space<vmem>>, vector<1x128x128xf32>
    %28 = vector.shape_cast %27 : vector<1x128x128xf32> to vector<128x128xf32>
    %c2_26 = arith.constant 2 : index
    %c0_27 = arith.constant 0 : index
    %c0_28 = arith.constant 0 : index
    %29 = vector.load %arg4[%c2_26, %c0_27, %c0_28] : memref<3x1x128xf32, #tpu.memory_space<vmem>>, vector<1x1x128xf32>
    %30 = vector.shape_cast %29 : vector<1x1x128xf32> to vector<1x128xf32>
    %cst_29 = arith.constant dense<0.000000e+00> : vector<8x128xf32>
    %31 = tpu.matmul %24, %26, %cst_29 {dimension_numbers = #tpu.dot_dimension_numbers<[1], [0], [0], [1], [0, 0, 1, 1], [], []>} : vector<8x128xf32>, vector<128x128xf32>, vector<8x128xf32> -> vector<8x128xf32>
    %cst_30 = arith.constant dense<0.000000e+00> : vector<8x128xf32>
    %32 = tpu.matmul %31, %28, %cst_30 {dimension_numbers = #tpu.dot_dimension_numbers<[1], [0], [0], [1], [0, 0, 1, 1], [], []>} : vector<8x128xf32>, vector<128x128xf32>, vector<8x128xf32> -> vector<8x128xf32>
    %33 = vector.broadcast %30 : vector<1x128xf32> to vector<8x128xf32>
    %34 = arith.addf %32, %33 : vector<8x128xf32>
    %35 = arith.mulf %0, %34 : vector<8x128xf32>
    %36 = arith.addf %35, %24 : vector<8x128xf32>
    %c0_31 = arith.constant 0 : index
    %c0_32 = arith.constant 0 : index
    %37 = vector.load %arg5[%c0_31, %c0_32] : memref<8x128xf32, #tpu.memory_space<vmem>>, vector<8x128xf32>
    tpu.vector_store %arg5[%c0_31, %c0_32], %36 {strides = array<i32>} : memref<8x128xf32, #tpu.memory_space<vmem>>, vector<8x128xf32>,
    return
  }
  func.func @transform_0(%arg0: i32) -> (i32, i32) {
    %c0_i32 = arith.constant 0 : i32
    %c0_i32_0 = arith.constant 0 : i32
    return %arg0, %c0_i32 : i32, i32
  }
  func.func @transform_1(%arg0: i32) -> (i32, i32, i32) {
    %c0_i32 = arith.constant 0 : i32
    %c0_i32_0 = arith.constant 0 : i32
    %c0_i32_1 = arith.constant 0 : i32
    %c0_i32_2 = arith.constant 0 : i32
    return %c0_i32, %c0_i32_0, %c0_i32_1 : i32, i32, i32
  }
  func.func @transform_2(%arg0: i32) -> (i32, i32, i32) {
    %c0_i32 = arith.constant 0 : i32
    %c0_i32_0 = arith.constant 0 : i32
    %c0_i32_1 = arith.constant 0 : i32
    %c0_i32_2 = arith.constant 0 : i32
    return %c0_i32, %c0_i32_0, %c0_i32_1 : i32, i32, i32
  }
  func.func @transform_3(%arg0: i32) -> (i32, i32, i32) {
    %c0_i32 = arith.constant 0 : i32
    %c0_i32_0 = arith.constant 0 : i32
    %c0_i32_1 = arith.constant 0 : i32
    %c0_i32_2 = arith.constant 0 : i32
    return %c0_i32, %c0_i32_0, %c0_i32_1 : i32, i32, i32
  }
  func.func @transform_4(%arg0: i32) -> (i32, i32) {
    %c0_i32 = arith.constant 0 : i32
    %c0_i32_0 = arith.constant 0 : i32
    return %arg0, %c0_i32 : i32, i32
  }
}

</mosaic_0001>

<llo_original>
// kernel: tpu_custom_call.1
$region0: #{tpu_custom_call.1}
  #allocation0 [shape = 'u32[]', space=smem, size = 0x4, offset = 0x4, fixed_abs, tag = 'smem constant byte address 0x4 - core index']
  #allocation1 [shape = 'u32[144,128]{1,0:T(1,128)}', space=vmem, size = 0x12000, scoped, tag = 'internal scratch']
  %s0 = inlined_call_operand.hbm [shape: f32[16,128], index: 0, kind: input, shape index: {}]
  %s1 = inlined_call_operand.hbm [shape: f32[3,128,128], index: 1, kind: input, shape index: {}]
  %s2 = inlined_call_operand.hbm [shape: f32[3,128,128], index: 2, kind: input, shape index: {}]
  %s3 = inlined_call_operand.vmem [shape: f32[3,1,128], index: 3, kind: input, shape index: {}]
  %s4 = inlined_call_operand.hbm [shape: f32[16,128], index: 4, kind: output, shape index: {}]
  %s5 = sld [smem:[#allocation0]]
  $region61: #{tpu_custom_call.1} parent=0
    _
  %s7 = ssub.s32 1, %s5
  %s8 = scalar_select 0, %s7, %s5
  $region1: #{tpu_custom_call.1} parent=0
    #allocation2 [shape = 'u8[8192]{0}', space=vmem, size = 0x2000, scoped, tag = 'input window, operand 0']
    #allocation3 [shape = 's32[2]{0}', space=sflag, size = 0x8, scoped, tag = 'scoped memory for tpu_custom_call.1']
    #allocation4 [shape = 's32[2]{0}', space=sflag, size = 0x8, scoped, tag = 'scoped memory for tpu_custom_call.1']
    #allocation5 [shape = 'u8[196608]{0}', space=vmem, size = 0x30000, scoped, tag = 'input window, operand 1, single buffered']
    #allocation6 [shape = 's32[1]{0}', space=sflag, size = 0x4, scoped, tag = 'scoped memory for tpu_custom_call.1']
    #allocation7 [shape = 'u8[196608]{0}', space=vmem, size = 0x30000, scoped, tag = 'input window, operand 2, single buffered']
    #allocation8 [shape = 'u8[8192]{0}', space=vmem, size = 0x2000, scoped, tag = 'output window, operand 0']
    %9 = vsyncpa [#allocation3], 0
    %s10 = scalar_lea.sflag [#allocation3], 1
    %11 = vsyncpa %s10, 0
    %12 = vsyncpa [#allocation6], 0
    %13 = vsyncpa [#allocation4], 0
    %s14 = scalar_lea.sflag [#allocation4], 1
    %15 = vsyncpa %s14, 0
    loop: start=0, step=1, limit=4
    $region2: #{tpu_custom_call.1} parent=1 // loop_pre_header
      _
    $region3: #{tpu_custom_call.1} parent=1 // loop_header
      %s17 = sphi 0, %s21
      %p18 = scmp.ge.s32.totalorder %s17, 4
      %s27 = sphi 0, %s29
      %s30 = sphi 0, %s27
      %s31 = sphi 0, %s30
      %s47 = sphi 0, %s31
      %s51 = sphi 0, %s51
      %s53 = sphi 0, %s51
      %s54 = sphi 0, %s53
      %s68 = sphi 0, %s54
      %s72 = sphi 0, %s72
      %s74 = sphi 0, %s72
      %s75 = sphi 0, %s74
      %s89 = sphi 0, %s75
      %s93 = sphi 0, %s93
      %s95 = sphi 0, %s93
      %s96 = sphi 0, %s95
      %s110 = sphi 0, %s96
      %s116 = sphi 0, %s118
      %s119 = sphi 0, %s116
      %s120 = sphi 0, %s119
      %s136 = sphi 0, %s120
    $region4: #{tpu_custom_call.1} parent=1 // loop_header_branch
      %20 = sbr.rel (%p18) target = $region8
    $region5: #{tpu_custom_call.1} parent=1 // loop_body
      %s22 = ssub.s32 %s17, 1
      %s23 = ssub.s32 %s17, 2
      %s24 = sadd.s32 %s17, 1
      %s25 = ssub.s32 %s17, %s24
      %p26 = scmp.eq.s32.totalorder %s25, 0
      %s28 = sadd.s32 %s27, 1
      %s29 = scalar_select %p26, %s27, %s28
      %p32 = pneg %p26
      %p33 = scmp.eq.s32.totalorder %s17, 1
      %p34 = por %p32, %p33
      %p35 = scmp.ne.s32.totalorder %s27, %s30
      %p36 = scmp.eq.s32.totalorder %s17, 0
      %p37 = por %p35, %p36
      %p38 = scmp.ne.s32.totalorder %s27, %s30
      %p39 = scmp.eq.s32.totalorder %s22, 1
      %p40 = por %p38, %p39
      %p41 = scmp.ne.s32.totalorder %s30, %s31
      %p42 = scmp.eq.s32.totalorder %s22, 0
      %p43 = por %p41, %p42
      %p44 = scmp.ne.s32.totalorder %s30, %s31
      %p45 = scmp.eq.s32.totalorder %s23, 1
      %p46 = por %p44, %p45
      %p48 = scmp.ne.s32.totalorder %s31, %s47
      %p49 = scmp.eq.s32.totalorder %s23, 0
      %p50 = por %p48, %p49
      %s52 = sadd.s32 %s51, 1
      %p55 = scmp.eq.s32.totalorder %s17, 1
      %p56 = scmp.ne.s32.totalorder %s51, %s53
      %p57 = scmp.eq.s32.totalorder %s17, 0
      %p58 = por %p56, %p57
      %p59 = scmp.ne.s32.totalorder %s51, %s53
      %p60 = scmp.eq.s32.totalorder %s22, 1
      %p61 = por %p59, %p60
      %p62 = scmp.ne.s32.totalorder %s53, %s54
      %p63 = scmp.eq.s32.totalorder %s22, 0
      %p64 = por %p62, %p63
      %p65 = scmp.ne.s32.totalorder %s53, %s54
      %p66 = scmp.eq.s32.totalorder %s23, 1
      %p67 = por %p65, %p66
      %p69 = scmp.ne.s32.totalorder %s54, %s68
      %p70 = scmp.eq.s32.totalorder %s23, 0
      %p71 = por %p69, %p70
      %s73 = sadd.s32 %s72, 1
      %p76 = scmp.eq.s32.totalorder %s17, 1
      %p77 = scmp.ne.s32.totalorder %s72, %s74
      %p78 = scmp.eq.s32.totalorder %s17, 0
      %p79 = por %p77, %p78
      %p80 = scmp.ne.s32.totalorder %s72, %s74
      %p81 = scmp.eq.s32.totalorder %s22, 1
      %p82 = por %p80, %p81
      %p83 = scmp.ne.s32.totalorder %s74, %s75
      %p84 = scmp.eq.s32.totalorder %s22, 0
      %p85 = por %p83, %p84
      %p86 = scmp.ne.s32.totalorder %s74, %s75
      %p87 = scmp.eq.s32.totalorder %s23, 1
      %p88 = por %p86, %p87
      %p90 = scmp.ne.s32.totalorder %s75, %s89
      %p91 = scmp.eq.s32.totalorder %s23, 0
      %p92 = por %p90, %p91
      %s94 = sadd.s32 %s93, 1
      %p97 = scmp.eq.s32.totalorder %s17, 1
      %p98 = scmp.ne.s32.totalorder %s93, %s95
      %p99 = scmp.eq.s32.totalorder %s17, 0
      %p100 = por %p98, %p99
      %p101 = scmp.ne.s32.totalorder %s93, %s95
      %p102 = scmp.eq.s32.totalorder %s22, 1
      %p103 = por %p101, %p102
      %p104 = scmp.ne.s32.totalorder %s95, %s96
      %p105 = scmp.eq.s32.totalorder %s22, 0
      %p106 = por %p104, %p105
      %p107 = scmp.ne.s32.totalorder %s95, %s96
      %p108 = scmp.eq.s32.totalorder %s23, 1
      %p109 = por %p107, %p108
      %p111 = scmp.ne.s32.totalorder %s96, %s110
      %p112 = scmp.eq.s32.totalorder %s23, 0
      %p113 = por %p111, %p112
      %s114 = ssub.s32 %s17, %s24
      %p115 = scmp.eq.s32.totalorder %s114, 0
      %s117 = sadd.s32 %s116, 1
      %s118 = scalar_select %p115, %s116, %s117
      %p121 = pneg %p115
      %p122 = scmp.eq.s32.totalorder %s17, 1
      %p123 = por %p121, %p122
      %p124 = scmp.ne.s32.totalorder %s116, %s119
      %p125 = scmp.eq.s32.totalorder %s17, 0
      %p126 = por %p124, %p125
      %p127 = scmp.ne.s32.totalorder %s116, %s119
      %p128 = scmp.eq.s32.totalorder %s22, 1
      %p129 = por %p127, %p128
      %p130 = scmp.ne.s32.totalorder %s119, %s120
      %p131 = scmp.eq.s32.totalorder %s22, 0
      %p132 = por %p130, %p131
      %p133 = scmp.ne.s32.totalorder %s119, %s120
      %p134 = scmp.eq.s32.totalorder %s23, 1
      %p135 = por %p133, %p134
      %p137 = scmp.ne.s32.totalorder %s120, %s136
      %p138 = scmp.eq.s32.totalorder %s23, 0
      %p139 = por %p137, %p138
      %p140 = scmp.le.s32.totalorder 1, %s17
      %p141 = scmp.lt.s32.totalorder %s17, 3
      %p142 = pnand %p140, %p141
      %p143 = pneg %p142
      // Predicated region
      $region9: #{tpu_custom_call.1} parent=5 // pred_check
        _
      $region10: #{tpu_custom_call.1} parent=5 // pred_check_branch
        %145 = sbr.rel (%p142) target = $region12
      $region11: #{tpu_custom_call.1} parent=5 // pred_region
        %s146 = ssub.s32 %s17, 1
        // Predicated region
        $region13: #{tpu_custom_call.1} parent=11 // pred_check
          %p147 = pneg %p64
        $region14: #{tpu_custom_call.1} parent=11 // pred_check_branch
          %149 = sbr.rel (%p147) target = $region16
        $region15: #{tpu_custom_call.1} parent=11 // pred_region
          %s151 = ssub.s32 6144, 6144
          %152 = vsyncadd [#allocation6], %s151
          %s153 = sshll.u32 [#allocation5], 4
          %s154 = int_to_ptr.vmem [resolvable:$true] %s153
          %159 = dma.hbm_to_vmem [thread:$0]  %s1, 6144, %s154, [#allocation6], 128, 128, 8
        $region16: #{tpu_custom_call.1} parent=11 // pred_fallthru
          _
        // Predicated region
        $region17: #{tpu_custom_call.1} parent=11 // pred_check
          %p160 = pneg %p85
        $region18: #{tpu_custom_call.1} parent=11 // pred_check_branch
          %162 = sbr.rel (%p160) target = $region20
        $region19: #{tpu_custom_call.1} parent=11 // pred_region
          %s164 = ssub.s32 6144, 6144
          %165 = vsyncadd [#allocation6], %s164
          %s166 = sshll.u32 [#allocation7], 4
          %s167 = int_to_ptr.vmem [resolvable:$true] %s166
          %172 = dma.hbm_to_vmem [thread:$0]  %s2, 6144, %s167, [#allocation6], 128, 128, 8
        $region20: #{tpu_custom_call.1} parent=11 // pred_fallthru
          _
        // Predicated region
        $region21: #{tpu_custom_call.1} parent=11 // pred_check
          %p173 = pneg %p106
        $region22: #{tpu_custom_call.1} parent=11 // pred_check_branch
          %175 = sbr.rel (%p173) target = $region24
        $region23: #{tpu_custom_call.1} parent=11 // pred_region
          _
        $region24: #{tpu_custom_call.1} parent=11 // pred_fallthru
          _
      $region12: #{tpu_custom_call.1} parent=5 // pred_fallthru
        _
      %p176 = scmp.lt.s32.totalorder %s17, 2
      // Predicated region
      $region25: #{tpu_custom_call.1} parent=5 // pred_check
        %p177 = pneg %p176
      $region26: #{tpu_custom_call.1} parent=5 // pred_check_branch
        %179 = sbr.rel (%p177) target = $region28
      $region27: #{tpu_custom_call.1} parent=5 // pred_region
        // Predicated region
        $region29: #{tpu_custom_call.1} parent=27 // pred_check
          %p180 = pneg %p37
        $region30: #{tpu_custom_call.1} parent=27 // pred_check_branch
          %182 = sbr.rel (%p180) target = $region32
        $region31: #{tpu_custom_call.1} parent=27 // pred_region
          %s183 = sand.u32 %s27, 1
          %s184 = scalar_lea.sflag [#allocation3], %s183
          %s185 = sand.u32 %s27, 1
          %s186 = smul.addr %s185, 8
          %s187 = scalar_lea.vmem [#allocation2], %s186
          %s189 = ssub.s32 128, 128
          %190 = vsyncadd %s184, %s189
          %s191 = smul.addr %s17, 128
          %s192 = scalar_lea.hbm %s0, %s191
          %s194 = sshll.u32 %s187, 4
          %s195 = int_to_ptr.vmem [resolvable:$true] %s194
          %197 = dma.hbm_to_vmem [thread:$0]  %s192, 128, %s195, %s184
        $region32: #{tpu_custom_call.1} parent=27 // pred_fallthru
          _
      $region28: #{tpu_custom_call.1} parent=5 // pred_fallthru
        _
      %p198 = scmp.le.s32.totalorder 1, %s17
      %p199 = scmp.lt.s32.totalorder %s17, 3
      %p200 = pnand %p198, %p199
      %p201 = pneg %p200
      // Predicated region
      $region33: #{tpu_custom_call.1} parent=5 // pred_check
        _
      $region34: #{tpu_custom_call.1} parent=5 // pred_check_branch
        %203 = sbr.rel (%p200) target = $region36
      $region35: #{tpu_custom_call.1} parent=5 // pred_region
        %s204 = ssub.s32 %s17, 1
        %s205 = sand.u32 %s30, 1
        %s206 = scalar_lea.sflag [#allocation3], %s205
        %s207 = sand.u32 %s30, 1
        %s208 = smul.addr %s207, 8
        %s209 = scalar_lea.vmem [#allocation2], %s208
        // Predicated region
        $region37: #{tpu_custom_call.1} parent=35 // pred_check
          %p210 = pneg %p43
        $region38: #{tpu_custom_call.1} parent=35 // pred_check_branch
          %212 = sbr.rel (%p210) target = $region40
        $region39: #{tpu_custom_call.1} parent=35 // pred_region
          %213 = dma.done %s206, 128
        $region40: #{tpu_custom_call.1} parent=35 // pred_fallthru
          _
        // Predicated region
        $region41: #{tpu_custom_call.1} parent=35 // pred_check
          %p214 = pneg %p64
        $region42: #{tpu_custom_call.1} parent=35 // pred_check_branch
          %216 = sbr.rel (%p214) target = $region44
        $region43: #{tpu_custom_call.1} parent=35 // pred_region
          %217 = dma.done [#allocation6], 6144
        $region44: #{tpu_custom_call.1} parent=35 // pred_fallthru
          _
        // Predicated region
        $region45: #{tpu_custom_call.1} parent=35 // pred_check
          %p218 = pneg %p85
        $region46: #{tpu_custom_call.1} parent=35 // pred_check_branch
          %220 = sbr.rel (%p218) target = $region48
        $region47: #{tpu_custom_call.1} parent=35 // pred_region
          %221 = dma.done [#allocation6], 6144
        $region48: #{tpu_custom_call.1} parent=35 // pred_fallthru
          _
        %s222 = sand.u32 %s30, 1
        %s223 = scalar_lea.sflag [#allocation3], %s222
        %s224 = sand.u32 %s30, 1
        %s225 = smul.addr %s224, 8
        %s226 = scalar_lea.vmem [#allocation2], %s225
        %p227 = pneg %p43
        %p228 = pneg %p40
        %p229 = pneg %p64
        %p230 = pneg %p61
        %p231 = pneg %p85
        %p232 = pneg %p82
        %p233 = pneg %p106
        %p234 = pneg %p103
        %p235 = pneg %p132
        %p236 = pneg %p129
        %s237 = sand.u32 %s119, 1
        %s238 = scalar_lea.sflag [#allocation4], %s237
        %s239 = sand.u32 %s119, 1
        %s240 = smul.addr %s239, 8
        %s241 = scalar_lea.vmem [#allocation8], %s240
        %v242 = vld [vmem:[%s209] sm:$0xff]
        %v243 = vld [vmem:[#allocation5] sm:$0xff]
        %v244 = vld [vmem:[#allocation5 + $0x8] sm:$0xff]
        %v245 = vld [vmem:[#allocation5 + $0x10] sm:$0xff]
        %v246 = vld [vmem:[#allocation5 + $0x18] sm:$0xff]
        %v247 = vld [vmem:[#allocation5 + $0x20] sm:$0xff]
        %v248 = vld [vmem:[#allocation5 + $0x28] sm:$0xff]
        %v249 = vld [vmem:[#allocation5 + $0x30] sm:$0xff]
        %v250 = vld [vmem:[#allocation5 + $0x38] sm:$0xff]
        %v251 = vld [vmem:[#allocation5 + $0x40] sm:$0xff]
        %v252 = vld [vmem:[#allocation5 + $0x48] sm:$0xff]
        %v253 = vld [vmem:[#allocation5 + $0x50] sm:$0xff]
        %v254 = vld [vmem:[#allocation5 + $0x58] sm:$0xff]
        %v255 = vld [vmem:[#allocation5 + $0x60] sm:$0xff]
        %v256 = vld [vmem:[#allocation5 + $0x68] sm:$0xff]
        %v257 = vld [vmem:[#allocation5 + $0x70] sm:$0xff]
        %v258 = vld [vmem:[#allocation5 + $0x78] sm:$0xff]
        %v259 = vld [vmem:[#allocation7] sm:$0xff]
        %v260 = vld [vmem:[#allocation7 + $0x8] sm:$0xff]
        %v261 = vld [vmem:[#allocation7 + $0x10] sm:$0xff]
        %v262 = vld [vmem:[#allocation7 + $0x18] sm:$0xff]
        %v263 = vld [vmem:[#allocation7 + $0x20] sm:$0xff]
        %v264 = vld [vmem:[#allocation7 + $0x28] sm:$0xff]
        %v265 = vld [vmem:[#allocation7 + $0x30] sm:$0xff]
        %v266 = vld [vmem:[#allocation7 + $0x38] sm:$0xff]
        %v267 = vld [vmem:[#allocation7 + $0x40] sm:$0xff]
        %v268 = vld [vmem:[#allocation7 + $0x48] sm:$0xff]
        %v269 = vld [vmem:[#allocation7 + $0x50] sm:$0xff]
        %v270 = vld [vmem:[#allocation7 + $0x58] sm:$0xff]
        %v271 = vld [vmem:[#allocation7 + $0x60] sm:$0xff]
        %v272 = vld [vmem:[#allocation7 + $0x68] sm:$0xff]
        %v273 = vld [vmem:[#allocation7 + $0x70] sm:$0xff]
        %v274 = vld [vmem:[#allocation7 + $0x78] sm:$0xff]
        %v275 = vld [vmem:[%s3] sm:$0x1]
        %276 = vmatprep.subr.mxu0 0.0
        %277 = vmatpush1.msra.mxu0 %v258
        %278 = vmatprep.subr.mxu0 0.0
        %279 = vmatpush1.msra.mxu0 %v257
        %280 = vmatprep.subr.mxu0 0.0
        %281 = vmatpush1.msra.mxu0 %v256
        %282 = vmatprep.subr.mxu0 0.0
        %283 = vmatpush1.msra.mxu0 %v255
        %284 = vmatprep.subr.mxu0 0.0
        %285 = vmatpush1.msra.mxu0 %v254
        %286 = vmatprep.subr.mxu0 0.0
        %287 = vmatpush1.msra.mxu0 %v253
        %288 = vmatprep.subr.mxu0 0.0
        %289 = vmatpush1.msra.mxu0 %v252
        %290 = vmatprep.subr.mxu0 0.0
        %291 = vmatpush1.msra.mxu0 %v251
        %292 = vmatprep.subr.mxu0 0.0
        %293 = vmatpush1.msra.mxu0 %v250
        %294 = vmatprep.subr.mxu0 0.0
        %295 = vmatpush1.msra.mxu0 %v249
        %296 = vmatprep.subr.mxu0 0.0
        %297 = vmatpush1.msra.mxu0 %v248
        %298 = vmatprep.subr.mxu0 0.0
        %299 = vmatpush1.msra.mxu0 %v247
        %300 = vmatprep.subr.mxu0 0.0
        %301 = vmatpush1.msra.mxu0 %v246
        %302 = vmatprep.subr.mxu0 0.0
        %303 = vmatpush1.msra.mxu0 %v245
        %304 = vmatprep.subr.mxu0 0.0
        %305 = vmatpush1.msra.mxu0 %v244
        %306 = vmatprep.subr.mxu0 0.0
        %307 = vmatpush1.msra.mxu0 %v243
        %308 = vmatprep.subr.mxu0 0.0
        %309 = vmatpush2.msra.mxu0 0.0
        %310 = vmatprep.subr.mxu0 0.0
        %311 = vmatpush2.msra.mxu0 0.0
        %312 = vmatprep.subr.mxu0 0.0
        %313 = vmatpush2.msra.mxu0 0.0
        %314 = vmatprep.subr.mxu0 0.0
        %315 = vmatpush2.msra.mxu0 0.0
        %316 = vmatprep.subr.mxu0 0.0
        %317 = vmatpush2.msra.mxu0 0.0
        %318 = vmatprep.subr.mxu0 0.0
        %319 = vmatpush2.msra.mxu0 0.0
        %320 = vmatprep.subr.mxu0 0.0
        %321 = vmatpush2.msra.mxu0 0.0
        %322 = vmatprep.subr.mxu0 0.0
        %323 = vmatpush2.msra.mxu0 0.0
        %324 = vmatprep.subr.mxu0 0.0
        %325 = vmatpush2.msra.mxu0 0.0
        %326 = vmatprep.subr.mxu0 0.0
        %327 = vmatpush2.msra.mxu0 0.0
        %328 = vmatprep.subr.mxu0 0.0
        %329 = vmatpush2.msra.mxu0 0.0
        %330 = vmatprep.subr.mxu0 0.0
        %331 = vmatpush2.msra.mxu0 0.0
        %332 = vmatprep.subr.mxu0 0.0
        %333 = vmatpush2.msra.mxu0 0.0
        %334 = vmatprep.subr.mxu0 0.0
        %335 = vmatpush2.msra.mxu0 0.0
        %336 = vmatprep.subr.mxu0 0.0
        %337 = vmatpush2.msra.mxu0 0.0
        %338 = vmatprep.subr.mxu0 0.0
        %339 = vmatpush2.msra.mxu0 0.0
        %340 = vmatprep.mubr.f32.mxu0 0.0
        %341 = vmatmul.mubr.f32.gmra.mxu0 %v242
        %v342 = vpop.f32.mrf.mxu0
        %v343 = vadd.f32 0.0, %v342
        %v344 = vpop.f32.mrf.mxu0
        %345 = vdwg.mxu0
        %v347 = vlaneseq
        %v348 = vshrl.u32 %v347, 7
        %v349 = vsub.s32 0, %v348
        %v350 = vrot.slane %v275, %v349
        %352 = vmatprep.subr.mxu0 0.0
        %353 = vmatpush1.msra.mxu0 %v274
        %354 = vmatprep.subr.mxu0 0.0
        %355 = vmatpush1.msra.mxu0 %v273
        %356 = vmatprep.subr.mxu0 0.0
        %357 = vmatpush1.msra.mxu0 %v272
        %358 = vmatprep.subr.mxu0 0.0
        %359 = vmatpush1.msra.mxu0 %v271
        %360 = vmatprep.subr.mxu0 0.0
        %361 = vmatpush1.msra.mxu0 %v270
        %362 = vmatprep.subr.mxu0 0.0
        %363 = vmatpush1.msra.mxu0 %v269
        %364 = vmatprep.subr.mxu0 0.0
        %365 = vmatpush1.msra.mxu0 %v268
        %366 = vmatprep.subr.mxu0 0.0
        %367 = vmatpush1.msra.mxu0 %v267
        %368 = vmatprep.subr.mxu0 0.0
        %369 = vmatpush1.msra.mxu0 %v266
        %370 = vmatprep.subr.mxu0 0.0
        %371 = vmatpush1.msra.mxu0 %v265
        %372 = vmatprep.subr.mxu0 0.0
        %373 = vmatpush1.msra.mxu0 %v264
        %374 = vmatprep.subr.mxu0 0.0
        %375 = vmatpush1.msra.mxu0 %v263
        %376 = vmatprep.subr.mxu0 0.0
        %377 = vmatpush1.msra.mxu0 %v262
        %378 = vmatprep.subr.mxu0 0.0
        %379 = vmatpush1.msra.mxu0 %v261
        %380 = vmatprep.subr.mxu0 0.0
        %381 = vmatpush1.msra.mxu0 %v260
        %382 = vmatprep.subr.mxu0 0.0
        %383 = vmatpush1.msra.mxu0 %v259
        %384 = vmatprep.subr.mxu0 0.0
        %385 = vmatpush2.msra.mxu0 0.0
        %386 = vmatprep.subr.mxu0 0.0
        %387 = vmatpush2.msra.mxu0 0.0
        %388 = vmatprep.subr.mxu0 0.0
        %389 = vmatpush2.msra.mxu0 0.0
        %390 = vmatprep.subr.mxu0 0.0
        %391 = vmatpush2.msra.mxu0 0.0
        %392 = vmatprep.subr.mxu0 0.0
        %393 = vmatpush2.msra.mxu0 0.0
        %394 = vmatprep.subr.mxu0 0.0
        %395 = vmatpush2.msra.mxu0 0.0
        %396 = vmatprep.subr.mxu0 0.0
        %397 = vmatpush2.msra.mxu0 0.0
        %398 = vmatprep.subr.mxu0 0.0
        %399 = vmatpush2.msra.mxu0 0.0
        %400 = vmatprep.subr.mxu0 0.0
        %401 = vmatpush2.msra.mxu0 0.0
        %402 = vmatprep.subr.mxu0 0.0
        %403 = vmatpush2.msra.mxu0 0.0
        %404 = vmatprep.subr.mxu0 0.0
        %405 = vmatpush2.msra.mxu0 0.0
        %406 = vmatprep.subr.mxu0 0.0
        %407 = vmatpush2.msra.mxu0 0.0
        %408 = vmatprep.subr.mxu0 0.0
        %409 = vmatpush2.msra.mxu0 0.0
        %410 = vmatprep.subr.mxu0 0.0
        %411 = vmatpush2.msra.mxu0 0.0
        %412 = vmatprep.subr.mxu0 0.0
        %413 = vmatpush2.msra.mxu0 0.0
        %414 = vmatprep.subr.mxu0 0.0
        %415 = vmatpush2.msra.mxu0 0.0
        %416 = vmatprep.mubr.f32.mxu0 0.0
        %417 = vmatmul.mubr.f32.gmra.mxu0 %v343
        %v418 = vpop.f32.mrf.mxu0
        %v419 = vadd.f32 %v350, %v418
        %v420 = vpop.f32.mrf.mxu0
        %421 = vdwg.mxu0
        %v422 = vmul.f32 %v242, %v419
        %v423 = vadd.f32 %v422, %v242
        %s424 = scalar_lea.vmem [#allocation5], 128
        %v425 = vld [vmem:[%s424] sm:$0xff]
        %v426 = vld [vmem:[%s424 + $0x8] sm:$0xff]
        %v427 = vld [vmem:[%s424 + $0x10] sm:$0xff]
        %v428 = vld [vmem:[%s424 + $0x18] sm:$0xff]
        %v429 = vld [vmem:[%s424 + $0x20] sm:$0xff]
        %v430 = vld [vmem:[%s424 + $0x28] sm:$0xff]
        %v431 = vld [vmem:[%s424 + $0x30] sm:$0xff]
        %v432 = vld [vmem:[%s424 + $0x38] sm:$0xff]
        %v433 = vld [vmem:[%s424 + $0x40] sm:$0xff]
        %v434 = vld [vmem:[%s424 + $0x48] sm:$0xff]
        %v435 = vld [vmem:[%s424 + $0x50] sm:$0xff]
        %v436 = vld [vmem:[%s424 + $0x58] sm:$0xff]
        %v437 = vld [vmem:[%s424 + $0x60] sm:$0xff]
        %v438 = vld [vmem:[%s424 + $0x68] sm:$0xff]
        %v439 = vld [vmem:[%s424 + $0x70] sm:$0xff]
        %v440 = vld [vmem:[%s424 + $0x78] sm:$0xff]
        %s441 = scalar_lea.vmem [#allocation7], 128
        %v442 = vld [vmem:[%s441] sm:$0xff]
        %v443 = vld [vmem:[%s441 + $0x8] sm:$0xff]
        %v444 = vld [vmem:[%s441 + $0x10] sm:$0xff]
        %v445 = vld [vmem:[%s441 + $0x18] sm:$0xff]
        %v446 = vld [vmem:[%s441 + $0x20] sm:$0xff]
        %v447 = vld [vmem:[%s441 + $0x28] sm:$0xff]
        %v448 = vld [vmem:[%s441 + $0x30] sm:$0xff]
        %v449 = vld [vmem:[%s441 + $0x38] sm:$0xff]
        %v450 = vld [vmem:[%s441 + $0x40] sm:$0xff]
        %v451 = vld [vmem:[%s441 + $0x48] sm:$0xff]
        %v452 = vld [vmem:[%s441 + $0x50] sm:$0xff]
        %v453 = vld [vmem:[%s441 + $0x58] sm:$0xff]
        %v454 = vld [vmem:[%s441 + $0x60] sm:$0xff]
        %v455 = vld [vmem:[%s441 + $0x68] sm:$0xff]
        %v456 = vld [vmem:[%s441 + $0x70] sm:$0xff]
        %v457 = vld [vmem:[%s441 + $0x78] sm:$0xff]
        %s458 = scalar_lea.vmem %s3, 1
        %v459 = vld [vmem:[%s458] sm:$0x1]
        %460 = vmatprep.subr.mxu0 0.0
        %461 = vmatpush1.msra.mxu0 %v440
        %462 = vmatprep.subr.mxu0 0.0
        %463 = vmatpush1.msra.mxu0 %v439
        %464 = vmatprep.subr.mxu0 0.0
        %465 = vmatpush1.msra.mxu0 %v438
        %466 = vmatprep.subr.mxu0 0.0
        %467 = vmatpush1.msra.mxu0 %v437
        %468 = vmatprep.subr.mxu0 0.0
        %469 = vmatpush1.msra.mxu0 %v436
        %470 = vmatprep.subr.mxu0 0.0
        %471 = vmatpush1.msra.mxu0 %v435
        %472 = vmatprep.subr.mxu0 0.0
        %473 = vmatpush1.msra.mxu0 %v434
        %474 = vmatprep.subr.mxu0 0.0
        %475 = vmatpush1.msra.mxu0 %v433
        %476 = vmatprep.subr.mxu0 0.0
        %477 = vmatpush1.msra.mxu0 %v432
        %478 = vmatprep.subr.mxu0 0.0
        %479 = vmatpush1.msra.mxu0 %v431
        %480 = vmatprep.subr.mxu0 0.0
        %481 = vmatpush1.msra.mxu0 %v430
        %482 = vmatprep.subr.mxu0 0.0
        %483 = vmatpush1.msra.mxu0 %v429
        %484 = vmatprep.subr.mxu0 0.0
        %485 = vmatpush1.msra.mxu0 %v428
        %486 = vmatprep.subr.mxu0 0.0
        %487 = vmatpush1.msra.mxu0 %v427
        %488 = vmatprep.subr.mxu0 0.0
        %489 = vmatpush1.msra.mxu0 %v426
        %490 = vmatprep.subr.mxu0 0.0
        %491 = vmatpush1.msra.mxu0 %v425
        %492 = vmatprep.subr.mxu0 0.0
        %493 = vmatpush2.msra.mxu0 0.0
        %494 = vmatprep.subr.mxu0 0.0
        %495 = vmatpush2.msra.mxu0 0.0
        %496 = vmatprep.subr.mxu0 0.0
        %497 = vmatpush2.msra.mxu0 0.0
        %498 = vmatprep.subr.mxu0 0.0
        %499 = vmatpush2.msra.mxu0 0.0
        %500 = vmatprep.subr.mxu0 0.0
        %501 = vmatpush2.msra.mxu0 0.0
        %502 = vmatprep.subr.mxu0 0.0
        %503 = vmatpush2.msra.mxu0 0.0
        %504 = vmatprep.subr.mxu0 0.0
        %505 = vmatpush2.msra.mxu0 0.0
        %506 = vmatprep.subr.mxu0 0.0
        %507 = vmatpush2.msra.mxu0 0.0
        %508 = vmatprep.subr.mxu0 0.0
        %509 = vmatpush2.msra.mxu0 0.0
        %510 = vmatprep.subr.mxu0 0.0
        %511 = vmatpush2.msra.mxu0 0.0
        %512 = vmatprep.subr.mxu0 0.0
        %513 = vmatpush2.msra.mxu0 0.0
        %514 = vmatprep.subr.mxu0 0.0
        %515 = vmatpush2.msra.mxu0 0.0
        %516 = vmatprep.subr.mxu0 0.0
        %517 = vmatpush2.msra.mxu0 0.0
        %518 = vmatprep.subr.mxu0 0.0
        %519 = vmatpush2.msra.mxu0 0.0
        %520 = vmatprep.subr.mxu0 0.0
        %521 = vmatpush2.msra.mxu0 0.0
        %522 = vmatprep.subr.mxu0 0.0
        %523 = vmatpush2.msra.mxu0 0.0
        %524 = vmatprep.mubr.f32.mxu0 0.0
        %525 = vmatmul.mubr.f32.gmra.mxu0 %v423
        %v526 = vpop.f32.mrf.mxu0
        %v527 = vadd.f32 0.0, %v526
        %v528 = vpop.f32.mrf.mxu0
        %529 = vdwg.mxu0
        %v531 = vlaneseq
        %v532 = vshrl.u32 %v531, 7
        %v533 = vsub.s32 0, %v532
        %v534 = vrot.slane %v459, %v533
        %536 = vmatprep.subr.mxu0 0.0
        %537 = vmatpush1.msra.mxu0 %v457
        %538 = vmatprep.subr.mxu0 0.0
        %539 = vmatpush1.msra.mxu0 %v456
        %540 = vmatprep.subr.mxu0 0.0
        %541 = vmatpush1.msra.mxu0 %v455
        %542 = vmatprep.subr.mxu0 0.0
        %543 = vmatpush1.msra.mxu0 %v454
        %544 = vmatprep.subr.mxu0 0.0
        %545 = vmatpush1.msra.mxu0 %v453
        %546 = vmatprep.subr.mxu0 0.0
        %547 = vmatpush1.msra.mxu0 %v452
        %548 = vmatprep.subr.mxu0 0.0
        %549 = vmatpush1.msra.mxu0 %v451
        %550 = vmatprep.subr.mxu0 0.0
        %551 = vmatpush1.msra.mxu0 %v450
        %552 = vmatprep.subr.mxu0 0.0
        %553 = vmatpush1.msra.mxu0 %v449
        %554 = vmatprep.subr.mxu0 0.0
        %555 = vmatpush1.msra.mxu0 %v448
        %556 = vmatprep.subr.mxu0 0.0
        %557 = vmatpush1.msra.mxu0 %v447
        %558 = vmatprep.subr.mxu0 0.0
        %559 = vmatpush1.msra.mxu0 %v446
        %560 = vmatprep.subr.mxu0 0.0
        %561 = vmatpush1.msra.mxu0 %v445
        %562 = vmatprep.subr.mxu0 0.0
        %563 = vmatpush1.msra.mxu0 %v444
        %564 = vmatprep.subr.mxu0 0.0
        %565 = vmatpush1.msra.mxu0 %v443
        %566 = vmatprep.subr.mxu0 0.0
        %567 = vmatpush1.msra.mxu0 %v442
        %568 = vmatprep.subr.mxu0 0.0
        %569 = vmatpush2.msra.mxu0 0.0
        %570 = vmatprep.subr.mxu0 0.0
        %571 = vmatpush2.msra.mxu0 0.0
        %572 = vmatprep.subr.mxu0 0.0
        %573 = vmatpush2.msra.mxu0 0.0
        %574 = vmatprep.subr.mxu0 0.0
        %575 = vmatpush2.msra.mxu0 0.0
        %576 = vmatprep.subr.mxu0 0.0
        %577 = vmatpush2.msra.mxu0 0.0
        %578 = vmatprep.subr.mxu0 0.0
        %579 = vmatpush2.msra.mxu0 0.0
        %580 = vmatprep.subr.mxu0 0.0
        %581 = vmatpush2.msra.mxu0 0.0
        %582 = vmatprep.subr.mxu0 0.0
        %583 = vmatpush2.msra.mxu0 0.0
        %584 = vmatprep.subr.mxu0 0.0
        %585 = vmatpush2.msra.mxu0 0.0
        %586 = vmatprep.subr.mxu0 0.0
        %587 = vmatpush2.msra.mxu0 0.0
        %588 = vmatprep.subr.mxu0 0.0
        %589 = vmatpush2.msra.mxu0 0.0
        %590 = vmatprep.subr.mxu0 0.0
        %591 = vmatpush2.msra.mxu0 0.0
        %592 = vmatprep.subr.mxu0 0.0
        %593 = vmatpush2.msra.mxu0 0.0
        %594 = vmatprep.subr.mxu0 0.0
        %595 = vmatpush2.msra.mxu0 0.0
        %596 = vmatprep.subr.mxu0 0.0
        %597 = vmatpush2.msra.mxu0 0.0
        %598 = vmatprep.subr.mxu0 0.0
        %599 = vmatpush2.msra.mxu0 0.0
        %600 = vmatprep.mubr.f32.mxu0 0.0
        %601 = vmatmul.mubr.f32.gmra.mxu0 %v527
        %v602 = vpop.f32.mrf.mxu0
        %v603 = vadd.f32 %v534, %v602
        %v604 = vpop.f32.mrf.mxu0
        %605 = vdwg.mxu0
        %v606 = vmul.f32 %v242, %v603
        %v607 = vadd.f32 %v606, %v423
        %s608 = scalar_lea.vmem [#allocation5], 256
        %v609 = vld [vmem:[%s608] sm:$0xff]
        %v610 = vld [vmem:[%s608 + $0x8] sm:$0xff]
        %v611 = vld [vmem:[%s608 + $0x10] sm:$0xff]
        %v612 = vld [vmem:[%s608 + $0x18] sm:$0xff]
        %v613 = vld [vmem:[%s608 + $0x20] sm:$0xff]
        %v614 = vld [vmem:[%s608 + $0x28] sm:$0xff]
        %v615 = vld [vmem:[%s608 + $0x30] sm:$0xff]
        %v616 = vld [vmem:[%s608 + $0x38] sm:$0xff]
        %v617 = vld [vmem:[%s608 + $0x40] sm:$0xff]
        %v618 = vld [vmem:[%s608 + $0x48] sm:$0xff]
        %v619 = vld [vmem:[%s608 + $0x50] sm:$0xff]
        %v620 = vld [vmem:[%s608 + $0x58] sm:$0xff]
        %v621 = vld [vmem:[%s608 + $0x60] sm:$0xff]
        %v622 = vld [vmem:[%s608 + $0x68] sm:$0xff]
        %v623 = vld [vmem:[%s608 + $0x70] sm:$0xff]
        %v624 = vld [vmem:[%s608 + $0x78] sm:$0xff]
        %s625 = scalar_lea.vmem [#allocation7], 256
        %v626 = vld [vmem:[%s625] sm:$0xff]
        %v627 = vld [vmem:[%s625 + $0x8] sm:$0xff]
        %v628 = vld [vmem:[%s625 + $0x10] sm:$0xff]
        %v629 = vld [vmem:[%s625 + $0x18] sm:$0xff]
        %v630 = vld [vmem:[%s625 + $0x20] sm:$0xff]
        %v631 = vld [vmem:[%s625 + $0x28] sm:$0xff]
        %v632 = vld [vmem:[%s625 + $0x30] sm:$0xff]
        %v633 = vld [vmem:[%s625 + $0x38] sm:$0xff]
        %v634 = vld [vmem:[%s625 + $0x40] sm:$0xff]
        %v635 = vld [vmem:[%s625 + $0x48] sm:$0xff]
        %v636 = vld [vmem:[%s625 + $0x50] sm:$0xff]
        %v637 = vld [vmem:[%s625 + $0x58] sm:$0xff]
        %v638 = vld [vmem:[%s625 + $0x60] sm:$0xff]
        %v639 = vld [vmem:[%s625 + $0x68] sm:$0xff]
        %v640 = vld [vmem:[%s625 + $0x70] sm:$0xff]
        %v641 = vld [vmem:[%s625 + $0x78] sm:$0xff]
        %s642 = scalar_lea.vmem %s3, 2
        %v643 = vld [vmem:[%s642] sm:$0x1]
        %644 = vmatprep.subr.mxu0 0.0
        %645 = vmatpush1.msra.mxu0 %v624
        %646 = vmatprep.subr.mxu0 0.0
        %647 = vmatpush1.msra.mxu0 %v623
        %648 = vmatprep.subr.mxu0 0.0
        %649 = vmatpush1.msra.mxu0 %v622
        %650 = vmatprep.subr.mxu0 0.0
        %651 = vmatpush1.msra.mxu0 %v621
        %652 = vmatprep.subr.mxu0 0.0
        %653 = vmatpush1.msra.mxu0 %v620
        %654 = vmatprep.subr.mxu0 0.0
        %655 = vmatpush1.msra.mxu0 %v619
        %656 = vmatprep.subr.mxu0 0.0
        %657 = vmatpush1.msra.mxu0 %v618
        %658 = vmatprep.subr.mxu0 0.0
        %659 = vmatpush1.msra.mxu0 %v617
        %660 = vmatprep.subr.mxu0 0.0
        %661 = vmatpush1.msra.mxu0 %v616
        %662 = vmatprep.subr.mxu0 0.0
        %663 = vmatpush1.msra.mxu0 %v615
        %664 = vmatprep.subr.mxu0 0.0
        %665 = vmatpush1.msra.mxu0 %v614
        %666 = vmatprep.subr.mxu0 0.0
        %667 = vmatpush1.msra.mxu0 %v613
        %668 = vmatprep.subr.mxu0 0.0
        %669 = vmatpush1.msra.mxu0 %v612
        %670 = vmatprep.subr.mxu0 0.0
        %671 = vmatpush1.msra.mxu0 %v611
        %672 = vmatprep.subr.mxu0 0.0
        %673 = vmatpush1.msra.mxu0 %v610
        %674 = vmatprep.subr.mxu0 0.0
        %675 = vmatpush1.msra.mxu0 %v609
        %676 = vmatprep.subr.mxu0 0.0
        %677 = vmatpush2.msra.mxu0 0.0
        %678 = vmatprep.subr.mxu0 0.0
        %679 = vmatpush2.msra.mxu0 0.0
        %680 = vmatprep.subr.mxu0 0.0
        %681 = vmatpush2.msra.mxu0 0.0
        %682 = vmatprep.subr.mxu0 0.0
        %683 = vmatpush2.msra.mxu0 0.0
        %684 = vmatprep.subr.mxu0 0.0
        %685 = vmatpush2.msra.mxu0 0.0
        %686 = vmatprep.subr.mxu0 0.0
        %687 = vmatpush2.msra.mxu0 0.0
        %688 = vmatprep.subr.mxu0 0.0
        %689 = vmatpush2.msra.mxu0 0.0
        %690 = vmatprep.subr.mxu0 0.0
        %691 = vmatpush2.msra.mxu0 0.0
        %692 = vmatprep.subr.mxu0 0.0
        %693 = vmatpush2.msra.mxu0 0.0
        %694 = vmatprep.subr.mxu0 0.0
        %695 = vmatpush2.msra.mxu0 0.0
        %696 = vmatprep.subr.mxu0 0.0
        %697 = vmatpush2.msra.mxu0 0.0
        %698 = vmatprep.subr.mxu0 0.0
        %699 = vmatpush2.msra.mxu0 0.0
        %700 = vmatprep.subr.mxu0 0.0
        %701 = vmatpush2.msra.mxu0 0.0
        %702 = vmatprep.subr.mxu0 0.0
        %703 = vmatpush2.msra.mxu0 0.0
        %704 = vmatprep.subr.mxu0 0.0
        %705 = vmatpush2.msra.mxu0 0.0
        %706 = vmatprep.subr.mxu0 0.0
        %707 = vmatpush2.msra.mxu0 0.0
        %708 = vmatprep.mubr.f32.mxu0 0.0
        %709 = vmatmul.mubr.f32.gmra.mxu0 %v607
        %v710 = vpop.f32.mrf.mxu0
        %v711 = vadd.f32 0.0, %v710
        %v712 = vpop.f32.mrf.mxu0
        %713 = vdwg.mxu0
        %v715 = vlaneseq
        %v716 = vshrl.u32 %v715, 7
        %v717 = vsub.s32 0, %v716
        %v718 = vrot.slane %v643, %v717
        %720 = vmatprep.subr.mxu0 0.0
        %721 = vmatpush1.msra.mxu0 %v641
        %722 = vmatprep.subr.mxu0 0.0
        %723 = vmatpush1.msra.mxu0 %v640
        %724 = vmatprep.subr.mxu0 0.0
        %725 = vmatpush1.msra.mxu0 %v639
        %726 = vmatprep.subr.mxu0 0.0
        %727 = vmatpush1.msra.mxu0 %v638
        %728 = vmatprep.subr.mxu0 0.0
        %729 = vmatpush1.msra.mxu0 %v637
        %730 = vmatprep.subr.mxu0 0.0
        %731 = vmatpush1.msra.mxu0 %v636
        %732 = vmatprep.subr.mxu0 0.0
        %733 = vmatpush1.msra.mxu0 %v635
        %734 = vmatprep.subr.mxu0 0.0
        %735 = vmatpush1.msra.mxu0 %v634
        %736 = vmatprep.subr.mxu0 0.0
        %737 = vmatpush1.msra.mxu0 %v633
        %738 = vmatprep.subr.mxu0 0.0
        %739 = vmatpush1.msra.mxu0 %v632
        %740 = vmatprep.subr.mxu0 0.0
        %741 = vmatpush1.msra.mxu0 %v631
        %742 = vmatprep.subr.mxu0 0.0
        %743 = vmatpush1.msra.mxu0 %v630
        %744 = vmatprep.subr.mxu0 0.0
        %745 = vmatpush1.msra.mxu0 %v629
        %746 = vmatprep.subr.mxu0 0.0
        %747 = vmatpush1.msra.mxu0 %v628
        %748 = vmatprep.subr.mxu0 0.0
        %749 = vmatpush1.msra.mxu0 %v627
        %750 = vmatprep.subr.mxu0 0.0
        %751 = vmatpush1.msra.mxu0 %v626
        %752 = vmatprep.subr.mxu0 0.0
        %753 = vmatpush2.msra.mxu0 0.0
        %754 = vmatprep.subr.mxu0 0.0
        %755 = vmatpush2.msra.mxu0 0.0
        %756 = vmatprep.subr.mxu0 0.0
        %757 = vmatpush2.msra.mxu0 0.0
        %758 = vmatprep.subr.mxu0 0.0
        %759 = vmatpush2.msra.mxu0 0.0
        %760 = vmatprep.subr.mxu0 0.0
        %761 = vmatpush2.msra.mxu0 0.0
        %762 = vmatprep.subr.mxu0 0.0
        %763 = vmatpush2.msra.mxu0 0.0
        %764 = vmatprep.subr.mxu0 0.0
        %765 = vmatpush2.msra.mxu0 0.0
        %766 = vmatprep.subr.mxu0 0.0
        %767 = vmatpush2.msra.mxu0 0.0
        %768 = vmatprep.subr.mxu0 0.0
        %769 = vmatpush2.msra.mxu0 0.0
        %770 = vmatprep.subr.mxu0 0.0
        %771 = vmatpush2.msra.mxu0 0.0
        %772 = vmatprep.subr.mxu0 0.0
        %773 = vmatpush2.msra.mxu0 0.0
        %774 = vmatprep.subr.mxu0 0.0
        %775 = vmatpush2.msra.mxu0 0.0
        %776 = vmatprep.subr.mxu0 0.0
        %777 = vmatpush2.msra.mxu0 0.0
        %778 = vmatprep.subr.mxu0 0.0
        %779 = vmatpush2.msra.mxu0 0.0
        %780 = vmatprep.subr.mxu0 0.0
        %781 = vmatpush2.msra.mxu0 0.0
        %782 = vmatprep.subr.mxu0 0.0
        %783 = vmatpush2.msra.mxu0 0.0
        %784 = vmatprep.mubr.f32.mxu0 0.0
        %785 = vmatmul.mubr.f32.gmra.mxu0 %v711
        %v786 = vpop.f32.mrf.mxu0
        %v787 = vadd.f32 %v718, %v786
        %v788 = vpop.f32.mrf.mxu0
        %789 = vdwg.mxu0
        %v790 = vmul.f32 %v242, %v787
        %v791 = vadd.f32 %v790, %v607
        %792 = vst [vmem:[%s241] sm:$0xff] %v791
        %s793 = sand.u32 %s119, 1
        %s794 = scalar_lea.sflag [#allocation4], %s793
        %s795 = sand.u32 %s119, 1
        %s796 = smul.addr %s795, 8
        %s797 = scalar_lea.vmem [#allocation8], %s796
        // Predicated region
        $region49: #{tpu_custom_call.1} parent=35 // pred_check
          %p798 = pneg %p129
        $region50: #{tpu_custom_call.1} parent=35 // pred_check_branch
          %800 = sbr.rel (%p798) target = $region52
        $region51: #{tpu_custom_call.1} parent=35 // pred_region
          %s802 = ssub.s32 128, 128
          %803 = vsyncadd %s794, %s802
          %s804 = smul.addr %s22, 128
          %s805 = scalar_lea.hbm %s4, %s804
          %s807 = sshll.u32 %s797, 4
          %s808 = int_to_ptr.vmem [resolvable:$true] %s807
          %810 = dma.vmem_to_hbm [thread:$0]  %s808, 128, %s805, %s794
        $region52: #{tpu_custom_call.1} parent=35 // pred_fallthru
          _
      $region36: #{tpu_custom_call.1} parent=5 // pred_fallthru
        _
      %p811 = scmp.le.s32.totalorder 2, %s17
      // Predicated region
      $region53: #{tpu_custom_call.1} parent=5 // pred_check
        %p812 = pneg %p811
      $region54: #{tpu_custom_call.1} parent=5 // pred_check_branch
        %814 = sbr.rel (%p812) target = $region56
      $region55: #{tpu_custom_call.1} parent=5 // pred_region
        %s815 = ssub.s32 %s17, 2
        // Predicated region
        $region57: #{tpu_custom_call.1} parent=55 // pred_check
          %p816 = pneg %p135
        $region58: #{tpu_custom_call.1} parent=55 // pred_check_branch
          %818 = sbr.rel (%p816) target = $region60
        $region59: #{tpu_custom_call.1} parent=55 // pred_region
          %s819 = sand.u32 %s120, 1
          %s820 = scalar_lea.sflag [#allocation4], %s819
          %s821 = sand.u32 %s120, 1
          %s822 = smul.addr %s821, 8
          %s823 = scalar_lea.vmem [#allocation8], %s822
          %824 = dma.done %s820, 128
        $region60: #{tpu_custom_call.1} parent=55 // pred_fallthru
          _
      $region56: #{tpu_custom_call.1} parent=5 // pred_fallthru
        _
    $region6: #{tpu_custom_call.1} parent=1 // loop_footer
      %s21 = sadd.s32 1, %s17
    $region7: #{tpu_custom_call.1} parent=1 // loop_footer_branch
      %16 = sbr.rel target = $region3
    $region8: #{tpu_custom_call.1} parent=1 // loop_exit
      _
    %825 = vsyncpa [#allocation3], 1
    %s826 = scalar_lea.sflag [#allocation3], 1
    %827 = vsyncpa %s826, 1
    %828 = vsyncpa [#allocation6], 1
    %829 = vsyncpa [#allocation4], 1
    %s830 = scalar_lea.sflag [#allocation4], 1
    %831 = vsyncpa %s830, 1

// kernel: tpu_custom_call.1
$region0: #{tpu_custom_call.1}
  #allocation0 [shape = 'u32[]', space=smem, size = 0x4, offset = 0x4, fixed_abs, tag = 'smem constant byte address 0x4 - core index']
  #allocation1 [shape = 'u32[144,128]{1,0:T(1,128)}', space=vmem, size = 0x12000, scoped, tag = 'internal scratch']
  %s0 = inlined_call_operand.hbm [shape: f32[16,128], index: 0, kind: input, shape index: {}]
  %s1 = inlined_call_operand.hbm [shape: f32[3,128,128], index: 1, kind: input, shape index: {}]
  %s2 = inlined_call_operand.hbm [shape: f32[3,128,128], index: 2, kind: input, shape index: {}]
  %s3 = inlined_call_operand.vmem [shape: f32[3,1,128], index: 3, kind: input, shape index: {}]
  %s4 = inlined_call_operand.hbm [shape: f32[16,128], index: 4, kind: output, shape index: {}]
  %s5 = sld [smem:[#allocation0]]
  $region61: #{tpu_custom_call.1} parent=0
    _
  %s7 = ssub.s32 1, %s5
  %s8 = scalar_select 0, %s7, %s5
  $region1: #{tpu_custom_call.1} parent=0
    #allocation2 [shape = 'u8[8192]{0}', space=vmem, size = 0x2000, scoped, tag = 'input window, operand 0']
    #allocation3 [shape = 's32[2]{0}', space=sflag, size = 0x8, scoped, tag = 'scoped memory for tpu_custom_call.1']
    #allocation4 [shape = 's32[2]{0}', space=sflag, size = 0x8, scoped, tag = 'scoped memory for tpu_custom_call.1']
    #allocation5 [shape = 'u8[196608]{0}', space=vmem, size = 0x30000, scoped, tag = 'input window, operand 1, single buffered']
    #allocation6 [shape = 's32[1]{0}', space=sflag, size = 0x4, scoped, tag = 'scoped memory for tpu_custom_call.1']
    #allocation7 [shape = 'u8[196608]{0}', space=vmem, size = 0x30000, scoped, tag = 'input window, operand 2, single buffered']
    #allocation8 [shape = 'u8[8192]{0}', space=vmem, size = 0x2000, scoped, tag = 'output window, operand 0']
    %9 = vsyncpa [#allocation3], 0
    %s10 = scalar_lea.sflag [#allocation3], 1
    %11 = vsyncpa %s10, 0
    %12 = vsyncpa [#allocation6], 0
    %13 = vsyncpa [#allocation4], 0
    %s14 = scalar_lea.sflag [#allocation4], 1
    %15 = vsyncpa %s14, 0
    loop: start=0, step=1, limit=4
    $region2: #{tpu_custom_call.1} parent=1 // loop_pre_header
      _
    $region3: #{tpu_custom_call.1} parent=1 // loop_header
      %s17 = sphi 0, %s21
      %p18 = scmp.ge.s32.totalorder %s17, 4
      %s27 = sphi 0, %s29
      %s30 = sphi 0, %s27
      %s31 = sphi 0, %s30
      %s47 = sphi 0, %s31
      %s51 = sphi 0, %s51
      %s53 = sphi 0, %s51
      %s54 = sphi 0, %s53
      %s68 = sphi 0, %s54
      %s72 = sphi 0, %s72
      %s74 = sphi 0, %s72
      %s75 = sphi 0, %s74
      %s89 = sphi 0, %s75
      %s93 = sphi 0, %s93
      %s95 = sphi 0, %s93
      %s96 = sphi 0, %s95
      %s110 = sphi 0, %s96
      %s116 = sphi 0, %s118
      %s119 = sphi 0, %s116
      %s120 = sphi 0, %s119
      %s136 = sphi 0, %s120
    $region4: #{tpu_custom_call.1} parent=1 // loop_header_branch
      %20 = sbr.rel (%p18) target = $region8
    $region5: #{tpu_custom_call.1} parent=1 // loop_body
      %s22 = ssub.s32 %s17, 1
      %s23 = ssub.s32 %s17, 2
      %s24 = sadd.s32 %s17, 1
      %s25 = ssub.s32 %s17, %s24
      %p26 = scmp.eq.s32.totalorder %s25, 0
      %s28 = sadd.s32 %s27, 1
      %s29 = scalar_select %p26, %s27, %s28
      %p32 = pneg %p26
      %p33 = scmp.eq.s32.totalorder %s17, 1
      %p34 = por %p32, %p33
      %p35 = scmp.ne.s32.totalorder %s27, %s30
      %p36 = scmp.eq.s32.totalorder %s17, 0
      %p37 = por %p35, %p36
      %p38 = scmp.ne.s32.totalorder %s27, %s30
      %p39 = scmp.eq.s32.totalorder %s22, 1
      %p40 = por %p38, %p39
      %p41 = scmp.ne.s32.totalorder %s30, %s31
      %p42 = scmp.eq.s32.totalorder %s22, 0
      %p43 = por %p41, %p42
      %p44 = scmp.ne.s32.totalorder %s30, %s31
      %p45 = scmp.eq.s32.totalorder %s23, 1
      %p46 = por %p44, %p45
      %p48 = scmp.ne.s32.totalorder %s31, %s47
      %p49 = scmp.eq.s32.totalorder %s23, 0
      %p50 = por %p48, %p49
      %s52 = sadd.s32 %s51, 1
      %p55 = scmp.eq.s32.totalorder %s17, 1
      %p56 = scmp.ne.s32.totalorder %s51, %s53
      %p57 = scmp.eq.s32.totalorder %s17, 0
      %p58 = por %p56, %p57
      %p59 = scmp.ne.s32.totalorder %s51, %s53
      %p60 = scmp.eq.s32.totalorder %s22, 1
      %p61 = por %p59, %p60
      %p62 = scmp.ne.s32.totalorder %s53, %s54
      %p63 = scmp.eq.s32.totalorder %s22, 0
      %p64 = por %p62, %p63
      %p65 = scmp.ne.s32.totalorder %s53, %s54
      %p66 = scmp.eq.s32.totalorder %s23, 1
      %p67 = por %p65, %p66
      %p69 = scmp.ne.s32.totalorder %s54, %s68
      %p70 = scmp.eq.s32.totalorder %s23, 0
      %p71 = por %p69, %p70
      %s73 = sadd.s32 %s72, 1
      %p76 = scmp.eq.s32.totalorder %s17, 1
      %p77 = scmp.ne.s32.totalorder %s72, %s74
      %p78 = scmp.eq.s32.totalorder %s17, 0
      %p79 = por %p77, %p78
      %p80 = scmp.ne.s32.totalorder %s72, %s74
      %p81 = scmp.eq.s32.totalorder %s22, 1
      %p82 = por %p80, %p81
      %p83 = scmp.ne.s32.totalorder %s74, %s75
      %p84 = scmp.eq.s32.totalorder %s22, 0
      %p85 = por %p83, %p84
      %p86 = scmp.ne.s32.totalorder %s74, %s75
      %p87 = scmp.eq.s32.totalorder %s23, 1
      %p88 = por %p86, %p87
      %p90 = scmp.ne.s32.totalorder %s75, %s89
      %p91 = scmp.eq.s32.totalorder %s23, 0
      %p92 = por %p90, %p91
      %s94 = sadd.s32 %s93, 1
      %p97 = scmp.eq.s32.totalorder %s17, 1
      %p98 = scmp.ne.s32.totalorder %s93, %s95
      %p99 = scmp.eq.s32.totalorder %s17, 0
      %p100 = por %p98, %p99
      %p101 = scmp.ne.s32.totalorder %s93, %s95
      %p102 = scmp.eq.s32.totalorder %s22, 1
      %p103 = por %p101, %p102
      %p104 = scmp.ne.s32.totalorder %s95, %s96
      %p105 = scmp.eq.s32.totalorder %s22, 0
      %p106 = por %p104, %p105
      %p107 = scmp.ne.s32.totalorder %s95, %s96
      %p108 = scmp.eq.s32.totalorder %s23, 1
      %p109 = por %p107, %p108
      %p111 = scmp.ne.s32.totalorder %s96, %s110
      %p112 = scmp.eq.s32.totalorder %s23, 0
      %p113 = por %p111, %p112
      %s114 = ssub.s32 %s17, %s24
      %p115 = scmp.eq.s32.totalorder %s114, 0
      %s117 = sadd.s32 %s116, 1
      %s118 = scalar_select %p115, %s116, %s117
      %p121 = pneg %p115
      %p122 = scmp.eq.s32.totalorder %s17, 1
      %p123 = por %p121, %p122
      %p124 = scmp.ne.s32.totalorder %s116, %s119
      %p125 = scmp.eq.s32.totalorder %s17, 0
      %p126 = por %p124, %p125
      %p127 = scmp.ne.s32.totalorder %s116, %s119
      %p128 = scmp.eq.s32.totalorder %s22, 1
      %p129 = por %p127, %p128
      %p130 = scmp.ne.s32.totalorder %s119, %s120
      %p131 = scmp.eq.s32.totalorder %s22, 0
      %p132 = por %p130, %p131
      %p133 = scmp.ne.s32.totalorder %s119, %s120
      %p134 = scmp.eq.s32.totalorder %s23, 1
      %p135 = por %p133, %p134
      %p137 = scmp.ne.s32.totalorder %s120, %s136
      %p138 = scmp.eq.s32.totalorder %s23, 0
      %p139 = por %p137, %p138
      %p140 = scmp.le.s32.totalorder 1, %s17
      %p141 = scmp.lt.s32.totalorder %s17, 3
      %p142 = pnand %p140, %p141
      %p143 = pneg %p142
      // Predicated region
      $region9: #{tpu_custom_call.1} parent=5 // pred_check
        _
      $region10: #{tpu_custom_call.1} parent=5 // pred_check_branch
        %145 = sbr.rel (%p142) target = $region12
      $region11: #{tpu_custom_call.1} parent=5 // pred_region
        %s146 = ssub.s32 %s17, 1
        // Predicated region
        $region13: #{tpu_custom_call.1} parent=11 // pred_check
          %p147 = pneg %p64
        $region14: #{tpu_custom_call.1} parent=11 // pred_check_branch
          %149 = sbr.rel (%p147) target = $region16
        $region15: #{tpu_custom_call.1} parent=11 // pred_region
          %s151 = ssub.s32 6144, 6144
          %152 = vsyncadd [#allocation6], %s151
          %s153 = sshll.u32 [#allocation5], 4
          %s154 = int_to_ptr.vmem [resolvable:$true] %s153
          %159 = dma.hbm_to_vmem [thread:$0]  %s1, 6144, %s154, [#allocation6], 128, 128, 8
        $region16: #{tpu_custom_call.1} parent=11 // pred_fallthru
          _
        // Predicated region
        $region17: #{tpu_custom_call.1} parent=11 // pred_check
          %p160 = pneg %p85
        $region18: #{tpu_custom_call.1} parent=11 // pred_check_branch
          %162 = sbr.rel (%p160) target = $region20
        $region19: #{tpu_custom_call.1} parent=11 // pred_region
          %s164 = ssub.s32 6144, 6144
          %165 = vsyncadd [#allocation6], %s164
          %s166 = sshll.u32 [#allocation7], 4
          %s167 = int_to_ptr.vmem [resolvable:$true] %s166
          %172 = dma.hbm_to_vmem [thread:$0]  %s2, 6144, %s167, [#allocation6], 128, 128, 8
        $region20: #{tpu_custom_call.1} parent=11 // pred_fallthru
          _
        // Predicated region
        $region21: #{tpu_custom_call.1} parent=11 // pred_check
          %p173 = pneg %p106
        $region22: #{tpu_custom_call.1} parent=11 // pred_check_branch
          %175 = sbr.rel (%p173) target = $region24
        $region23: #{tpu_custom_call.1} parent=11 // pred_region
          _
        $region24: #{tpu_custom_call.1} parent=11 // pred_fallthru
          _
      $region12: #{tpu_custom_call.1} parent=5 // pred_fallthru
        _
      %p176 = scmp.lt.s32.totalorder %s17, 2
      // Predicated region
      $region25: #{tpu_custom_call.1} parent=5 // pred_check
        %p177 = pneg %p176
      $region26: #{tpu_custom_call.1} parent=5 // pred_check_branch
        %179 = sbr.rel (%p177) target = $region28
      $region27: #{tpu_custom_call.1} parent=5 // pred_region
        // Predicated region
        $region29: #{tpu_custom_call.1} parent=27 // pred_check
          %p180 = pneg %p37
        $region30: #{tpu_custom_call.1} parent=27 // pred_check_branch
          %182 = sbr.rel (%p180) target = $region32
        $region31: #{tpu_custom_call.1} parent=27 // pred_region
          %s183 = sand.u32 %s27, 1
          %s184 = scalar_lea.sflag [#allocation3], %s183
          %s185 = sand.u32 %s27, 1
          %s186 = smul.addr %s185, 8
          %s187 = scalar_lea.vmem [#allocation2], %s186
          %s189 = ssub.s32 128, 128
          %190 = vsyncadd %s184, %s189
          %s191 = smul.addr %s17, 128
          %s192 = scalar_lea.hbm %s0, %s191
          %s194 = sshll.u32 %s187, 4
          %s195 = int_to_ptr.vmem [resolvable:$true] %s194
          %197 = dma.hbm_to_vmem [thread:$0]  %s192, 128, %s195, %s184
        $region32: #{tpu_custom_call.1} parent=27 // pred_fallthru
          _
      $region28: #{tpu_custom_call.1} parent=5 // pred_fallthru
        _
      %p198 = scmp.le.s32.totalorder 1, %s17
      %p199 = scmp.lt.s32.totalorder %s17, 3
      %p200 = pnand %p198, %p199
      %p201 = pneg %p200
      // Predicated region
      $region33: #{tpu_custom_call.1} parent=5 // pred_check
        _
      $region34: #{tpu_custom_call.1} parent=5 // pred_check_branch
        %203 = sbr.rel (%p200) target = $region36
      $region35: #{tpu_custom_call.1} parent=5 // pred_region
        %s204 = ssub.s32 %s17, 1
        %s205 = sand.u32 %s30, 1
        %s206 = scalar_lea.sflag [#allocation3], %s205
        %s207 = sand.u32 %s30, 1
        %s208 = smul.addr %s207, 8
        %s209 = scalar_lea.vmem [#allocation2], %s208
        // Predicated region
        $region37: #{tpu_custom_call.1} parent=35 // pred_check
          %p210 = pneg %p43
        $region38: #{tpu_custom_call.1} parent=35 // pred_check_branch
          %212 = sbr.rel (%p210) target = $region40
        $region39: #{tpu_custom_call.1} parent=35 // pred_region
          %213 = dma.done %s206, 128
        $region40: #{tpu_custom_call.1} parent=35 // pred_fallthru
          _
        // Predicated region
        $region41: #{tpu_custom_call.1} parent=35 // pred_check
          %p214 = pneg %p64
        $region42: #{tpu_custom_call.1} parent=35 // pred_check_branch
          %216 = sbr.rel (%p214) target = $region44
        $region43: #{tpu_custom_call.1} parent=35 // pred_region
          %217 = dma.done [#allocation6], 6144
        $region44: #{tpu_custom_call.1} parent=35 // pred_fallthru
          _
        // Predicated region
        $region45: #{tpu_custom_call.1} parent=35 // pred_check
          %p218 = pneg %p85
        $region46: #{tpu_custom_call.1} parent=35 // pred_check_branch
          %220 = sbr.rel (%p218) target = $region48
        $region47: #{tpu_custom_call.1} parent=35 // pred_region
          %221 = dma.done [#allocation6], 6144
        $region48: #{tpu_custom_call.1} parent=35 // pred_fallthru
          _
        %s222 = sand.u32 %s30, 1
        %s223 = scalar_lea.sflag [#allocation3], %s222
        %s224 = sand.u32 %s30, 1
        %s225 = smul.addr %s224, 8
        %s226 = scalar_lea.vmem [#allocation2], %s225
        %p227 = pneg %p43
        %p228 = pneg %p40
        %p229 = pneg %p64
        %p230 = pneg %p61
        %p231 = pneg %p85
        %p232 = pneg %p82
        %p233 = pneg %p106
        %p234 = pneg %p103
        %p235 = pneg %p132
        %p236 = pneg %p129
        %s237 = sand.u32 %s119, 1
        %s238 = scalar_lea.sflag [#allocation4], %s237
        %s239 = sand.u32 %s119, 1
        %s240 = smul.addr %s239, 8
        %s241 = scalar_lea.vmem [#allocation8], %s240
        %v242 = vld [vmem:[%s209] sm:$0xff]
        %v243 = vld [vmem:[#allocation5] sm:$0xff]
        %v244 = vld [vmem:[#allocation5 + $0x8] sm:$0xff]
        %v245 = vld [vmem:[#allocation5 + $0x10] sm:$0xff]
        %v246 = vld [vmem:[#allocation5 + $0x18] sm:$0xff]
        %v247 = vld [vmem:[#allocation5 + $0x20] sm:$0xff]
        %v248 = vld [vmem:[#allocation5 + $0x28] sm:$0xff]
        %v249 = vld [vmem:[#allocation5 + $0x30] sm:$0xff]
        %v250 = vld [vmem:[#allocation5 + $0x38] sm:$0xff]
        %v251 = vld [vmem:[#allocation5 + $0x40] sm:$0xff]
        %v252 = vld [vmem:[#allocation5 + $0x48] sm:$0xff]
        %v253 = vld [vmem:[#allocation5 + $0x50] sm:$0xff]
        %v254 = vld [vmem:[#allocation5 + $0x58] sm:$0xff]
        %v255 = vld [vmem:[#allocation5 + $0x60] sm:$0xff]
        %v256 = vld [vmem:[#allocation5 + $0x68] sm:$0xff]
        %v257 = vld [vmem:[#allocation5 + $0x70] sm:$0xff]
        %v258 = vld [vmem:[#allocation5 + $0x78] sm:$0xff]
        %v259 = vld [vmem:[#allocation7] sm:$0xff]
        %v260 = vld [vmem:[#allocation7 + $0x8] sm:$0xff]
        %v261 = vld [vmem:[#allocation7 + $0x10] sm:$0xff]
        %v262 = vld [vmem:[#allocation7 + $0x18] sm:$0xff]
        %v263 = vld [vmem:[#allocation7 + $0x20] sm:$0xff]
        %v264 = vld [vmem:[#allocation7 + $0x28] sm:$0xff]
        %v265 = vld [vmem:[#allocation7 + $0x30] sm:$0xff]
        %v266 = vld [vmem:[#allocation7 + $0x38] sm:$0xff]
        %v267 = vld [vmem:[#allocation7 + $0x40] sm:$0xff]
        %v268 = vld [vmem:[#allocation7 + $0x48] sm:$0xff]
        %v269 = vld [vmem:[#allocation7 + $0x50] sm:$0xff]
        %v270 = vld [vmem:[#allocation7 + $0x58] sm:$0xff]
        %v271 = vld [vmem:[#allocation7 + $0x60] sm:$0xff]
        %v272 = vld [vmem:[#allocation7 + $0x68] sm:$0xff]
        %v273 = vld [vmem:[#allocation7 + $0x70] sm:$0xff]
        %v274 = vld [vmem:[#allocation7 + $0x78] sm:$0xff]
        %v275 = vld [vmem:[%s3] sm:$0x1]
        %276 = vmatprep.subr.mxu0 0.0
        %277 = vmatpush1.msra.mxu0 %v258
        %278 = vmatprep.subr.mxu0 0.0
        %279 = vmatpush1.msra.mxu0 %v257
        %280 = vmatprep.subr.mxu0 0.0
        %281 = vmatpush1.msra.mxu0 %v256
        %282 = vmatprep.subr.mxu0 0.0
        %283 = vmatpush1.msra.mxu0 %v255
        %284 = vmatprep.subr.mxu0 0.0
        %285 = vmatpush1.msra.mxu0 %v254
        %286 = vmatprep.subr.mxu0 0.0
        %287 = vmatpush1.msra.mxu0 %v253
        %288 = vmatprep.subr.mxu0 0.0
        %289 = vmatpush1.msra.mxu0 %v252
        %290 = vmatprep.subr.mxu0 0.0
        %291 = vmatpush1.msra.mxu0 %v251
        %292 = vmatprep.subr.mxu0 0.0
        %293 = vmatpush1.msra.mxu0 %v250
        %294 = vmatprep.subr.mxu0 0.0
        %295 = vmatpush1.msra.mxu0 %v249
        %296 = vmatprep.subr.mxu0 0.0
        %297 = vmatpush1.msra.mxu0 %v248
        %298 = vmatprep.subr.mxu0 0.0
        %299 = vmatpush1.msra.mxu0 %v247
        %300 = vmatprep.subr.mxu0 0.0
        %301 = vmatpush1.msra.mxu0 %v246
        %302 = vmatprep.subr.mxu0 0.0
        %303 = vmatpush1.msra.mxu0 %v245
        %304 = vmatprep.subr.mxu0 0.0
        %305 = vmatpush1.msra.mxu0 %v244
        %306 = vmatprep.subr.mxu0 0.0
        %307 = vmatpush1.msra.mxu0 %v243
        %308 = vmatprep.subr.mxu0 0.0
        %309 = vmatpush2.msra.mxu0 0.0
        %310 = vmatprep.subr.mxu0 0.0
        %311 = vmatpush2.msra.mxu0 0.0
        %312 = vmatprep.subr.mxu0 0.0
        %313 = vmatpush2.msra.mxu0 0.0
        %314 = vmatprep.subr.mxu0 0.0
        %315 = vmatpush2.msra.mxu0 0.0
        %316 = vmatprep.subr.mxu0 0.0
        %317 = vmatpush2.msra.mxu0 0.0
        %318 = vmatprep.subr.mxu0 0.0
        %319 = vmatpush2.msra.mxu0 0.0
        %320 = vmatprep.subr.mxu0 0.0
        %321 = vmatpush2.msra.mxu0 0.0
        %322 = vmatprep.subr.mxu0 0.0
        %323 = vmatpush2.msra.mxu0 0.0
        %324 = vmatprep.subr.mxu0 0.0
        %325 = vmatpush2.msra.mxu0 0.0
        %326 = vmatprep.subr.mxu0 0.0
        %327 = vmatpush2.msra.mxu0 0.0
        %328 = vmatprep.subr.mxu0 0.0
        %329 = vmatpush2.msra.mxu0 0.0
        %330 = vmatprep.subr.mxu0 0.0
        %331 = vmatpush2.msra.mxu0 0.0
        %332 = vmatprep.subr.mxu0 0.0
        %333 = vmatpush2.msra.mxu0 0.0
        %334 = vmatprep.subr.mxu0 0.0
        %335 = vmatpush2.msra.mxu0 0.0
        %336 = vmatprep.subr.mxu0 0.0
        %337 = vmatpush2.msra.mxu0 0.0
        %338 = vmatprep.subr.mxu0 0.0
        %339 = vmatpush2.msra.mxu0 0.0
        %340 = vmatprep.mubr.f32.mxu0 0.0
        %341 = vmatmul.mubr.f32.gmra.mxu0 %v242
        %v342 = vpop.f32.mrf.mxu0
        %v343 = vadd.f32 0.0, %v342
        %v344 = vpop.f32.mrf.mxu0
        %345 = vdwg.mxu0
        %v347 = vlaneseq
        %v348 = vshrl.u32 %v347, 7
        %v349 = vsub.s32 0, %v348
        %v350 = vrot.slane %v275, %v349
        %352 = vmatprep.subr.mxu0 0.0
        %353 = vmatpush1.msra.mxu0 %v274
        %354 = vmatprep.subr.mxu0 0.0
        %355 = vmatpush1.msra.mxu0 %v273
        %356 = vmatprep.subr.mxu0 0.0
        %357 = vmatpush1.msra.mxu0 %v272
        %358 = vmatprep.subr.mxu0 0.0
        %359 = vmatpush1.msra.mxu0 %v271
        %360 = vmatprep.subr.mxu0 0.0
        %361 = vmatpush1.msra.mxu0 %v270
        %362 = vmatprep.subr.mxu0 0.0
        %363 = vmatpush1.msra.mxu0 %v269
        %364 = vmatprep.subr.mxu0 0.0
        %365 = vmatpush1.msra.mxu0 %v268
        %366 = vmatprep.subr.mxu0 0.0
        %367 = vmatpush1.msra.mxu0 %v267
        %368 = vmatprep.subr.mxu0 0.0
        %369 = vmatpush1.msra.mxu0 %v266
        %370 = vmatprep.subr.mxu0 0.0
        %371 = vmatpush1.msra.mxu0 %v265
        %372 = vmatprep.subr.mxu0 0.0
        %373 = vmatpush1.msra.mxu0 %v264
        %374 = vmatprep.subr.mxu0 0.0
        %375 = vmatpush1.msra.mxu0 %v263
        %376 = vmatprep.subr.mxu0 0.0
        %377 = vmatpush1.msra.mxu0 %v262
        %378 = vmatprep.subr.mxu0 0.0
        %379 = vmatpush1.msra.mxu0 %v261
        %380 = vmatprep.subr.mxu0 0.0
        %381 = vmatpush1.msra.mxu0 %v260
        %382 = vmatprep.subr.mxu0 0.0
        %383 = vmatpush1.msra.mxu0 %v259
        %384 = vmatprep.subr.mxu0 0.0
        %385 = vmatpush2.msra.mxu0 0.0
        %386 = vmatprep.subr.mxu0 0.0
        %387 = vmatpush2.msra.mxu0 0.0
        %388 = vmatprep.subr.mxu0 0.0
        %389 = vmatpush2.msra.mxu0 0.0
        %390 = vmatprep.subr.mxu0 0.0
        %391 = vmatpush2.msra.mxu0 0.0
        %392 = vmatprep.subr.mxu0 0.0
        %393 = vmatpush2.msra.mxu0 0.0
        %394 = vmatprep.subr.mxu0 0.0
        %395 = vmatpush2.msra.mxu0 0.0
        %396 = vmatprep.subr.mxu0 0.0
        %397 = vmatpush2.msra.mxu0 0.0
        %398 = vmatprep.subr.mxu0 0.0
        %399 = vmatpush2.msra.mxu0 0.0
        %400 = vmatprep.subr.mxu0 0.0
        %401 = vmatpush2.msra.mxu0 0.0
        %402 = vmatprep.subr.mxu0 0.0
        %403 = vmatpush2.msra.mxu0 0.0
        %404 = vmatprep.subr.mxu0 0.0
        %405 = vmatpush2.msra.mxu0 0.0
        %406 = vmatprep.subr.mxu0 0.0
        %407 = vmatpush2.msra.mxu0 0.0
        %408 = vmatprep.subr.mxu0 0.0
        %409 = vmatpush2.msra.mxu0 0.0
        %410 = vmatprep.subr.mxu0 0.0
        %411 = vmatpush2.msra.mxu0 0.0
        %412 = vmatprep.subr.mxu0 0.0
        %413 = vmatpush2.msra.mxu0 0.0
        %414 = vmatprep.subr.mxu0 0.0
        %415 = vmatpush2.msra.mxu0 0.0
        %416 = vmatprep.mubr.f32.mxu0 0.0
        %417 = vmatmul.mubr.f32.gmra.mxu0 %v343
        %v418 = vpop.f32.mrf.mxu0
        %v419 = vadd.f32 %v350, %v418
        %v420 = vpop.f32.mrf.mxu0
        %421 = vdwg.mxu0
        %v422 = vmul.f32 %v242, %v419
        %v423 = vadd.f32 %v422, %v242
        %s424 = scalar_lea.vmem [#allocation5], 128
        %v425 = vld [vmem:[%s424] sm:$0xff]
        %v426 = vld [vmem:[%s424 + $0x8] sm:$0xff]
        %v427 = vld [vmem:[%s424 + $0x10] sm:$0xff]
        %v428 = vld [vmem:[%s424 + $0x18] sm:$0xff]
        %v429 = vld [vmem:[%s424 + $0x20] sm:$0xff]
        %v430 = vld [vmem:[%s424 + $0x28] sm:$0xff]
        %v431 = vld [vmem:[%s424 + $0x30] sm:$0xff]
        %v432 = vld [vmem:[%s424 + $0x38] sm:$0xff]
        %v433 = vld [vmem:[%s424 + $0x40] sm:$0xff]
        %v434 = vld [vmem:[%s424 + $0x48] sm:$0xff]
        %v435 = vld [vmem:[%s424 + $0x50] sm:$0xff]
        %v436 = vld [vmem:[%s424 + $0x58] sm:$0xff]
        %v437 = vld [vmem:[%s424 + $0x60] sm:$0xff]
        %v438 = vld [vmem:[%s424 + $0x68] sm:$0xff]
        %v439 = vld [vmem:[%s424 + $0x70] sm:$0xff]
        %v440 = vld [vmem:[%s424 + $0x78] sm:$0xff]
        %s441 = scalar_lea.vmem [#allocation7], 128
        %v442 = vld [vmem:[%s441] sm:$0xff]
        %v443 = vld [vmem:[%s441 + $0x8] sm:$0xff]
        %v444 = vld [vmem:[%s441 + $0x10] sm:$0xff]
        %v445 = vld [vmem:[%s441 + $0x18] sm:$0xff]
        %v446 = vld [vmem:[%s441 + $0x20] sm:$0xff]
        %v447 = vld [vmem:[%s441 + $0x28] sm:$0xff]
        %v448 = vld [vmem:[%s441 + $0x30] sm:$0xff]
        %v449 = vld [vmem:[%s441 + $0x38] sm:$0xff]
        %v450 = vld [vmem:[%s441 + $0x40] sm:$0xff]
        %v451 = vld [vmem:[%s441 + $0x48] sm:$0xff]
        %v452 = vld [vmem:[%s441 + $0x50] sm:$0xff]
        %v453 = vld [vmem:[%s441 + $0x58] sm:$0xff]
        %v454 = vld [vmem:[%s441 + $0x60] sm:$0xff]
        %v455 = vld [vmem:[%s441 + $0x68] sm:$0xff]
        %v456 = vld [vmem:[%s441 + $0x70] sm:$0xff]
        %v457 = vld [vmem:[%s441 + $0x78] sm:$0xff]
        %s458 = scalar_lea.vmem %s3, 1
        %v459 = vld [vmem:[%s458] sm:$0x1]
        %460 = vmatprep.subr.mxu0 0.0
        %461 = vmatpush1.msra.mxu0 %v440
        %462 = vmatprep.subr.mxu0 0.0
        %463 = vmatpush1.msra.mxu0 %v439
        %464 = vmatprep.subr.mxu0 0.0
        %465 = vmatpush1.msra.mxu0 %v438
        %466 = vmatprep.subr.mxu0 0.0
        %467 = vmatpush1.msra.mxu0 %v437
        %468 = vmatprep.subr.mxu0 0.0
        %469 = vmatpush1.msra.mxu0 %v436
        %470 = vmatprep.subr.mxu0 0.0
        %471 = vmatpush1.msra.mxu0 %v435
        %472 = vmatprep.subr.mxu0 0.0
        %473 = vmatpush1.msra.mxu0 %v434
        %474 = vmatprep.subr.mxu0 0.0
        %475 = vmatpush1.msra.mxu0 %v433
        %476 = vmatprep.subr.mxu0 0.0
        %477 = vmatpush1.msra.mxu0 %v432
        %478 = vmatprep.subr.mxu0 0.0
        %479 = vmatpush1.msra.mxu0 %v431
        %480 = vmatprep.subr.mxu0 0.0
        %481 = vmatpush1.msra.mxu0 %v430
        %482 = vmatprep.subr.mxu0 0.0
        %483 = vmatpush1.msra.mxu0 %v429
        %484 = vmatprep.subr.mxu0 0.0
        %485 = vmatpush1.msra.mxu0 %v428
        %486 = vmatprep.subr.mxu0 0.0
        %487 = vmatpush1.msra.mxu0 %v427
        %488 = vmatprep.subr.mxu0 0.0
        %489 = vmatpush1.msra.mxu0 %v426
        %490 = vmatprep.subr.mxu0 0.0
        %491 = vmatpush1.msra.mxu0 %v425
        %492 = vmatprep.subr.mxu0 0.0
        %493 = vmatpush2.msra.mxu0 0.0
        %494 = vmatprep.subr.mxu0 0.0
        %495 = vmatpush2.msra.mxu0 0.0
        %496 = vmatprep.subr.mxu0 0.0
        %497 = vmatpush2.msra.mxu0 0.0
        %498 = vmatprep.subr.mxu0 0.0
        %499 = vmatpush2.msra.mxu0 0.0
        %500 = vmatprep.subr.mxu0 0.0
        %501 = vmatpush2.msra.mxu0 0.0
        %502 = vmatprep.subr.mxu0 0.0
        %503 = vmatpush2.msra.mxu0 0.0
        %504 = vmatprep.subr.mxu0 0.0
        %505 = vmatpush2.msra.mxu0 0.0
        %506 = vmatprep.subr.mxu0 0.0
        %507 = vmatpush2.msra.mxu0 0.0
        %508 = vmatprep.subr.mxu0 0.0
        %509 = vmatpush2.msra.mxu0 0.0
        %510 = vmatprep.subr.mxu0 0.0
        %511 = vmatpush2.msra.mxu0 0.0
        %512 = vmatprep.subr.mxu0 0.0
        %513 = vmatpush2.msra.mxu0 0.0
        %514 = vmatprep.subr.mxu0 0.0
        %515 = vmatpush2.msra.mxu0 0.0
        %516 = vmatprep.subr.mxu0 0.0
        %517 = vmatpush2.msra.mxu0 0.0
        %518 = vmatprep.subr.mxu0 0.0
        %519 = vmatpush2.msra.mxu0 0.0
        %520 = vmatprep.subr.mxu0 0.0
        %521 = vmatpush2.msra.mxu0 0.0
        %522 = vmatprep.subr.mxu0 0.0
        %523 = vmatpush2.msra.mxu0 0.0
        %524 = vmatprep.mubr.f32.mxu0 0.0
        %525 = vmatmul.mubr.f32.gmra.mxu0 %v423
        %v526 = vpop.f32.mrf.mxu0
        %v527 = vadd.f32 0.0, %v526
        %v528 = vpop.f32.mrf.mxu0
        %529 = vdwg.mxu0
        %v531 = vlaneseq
        %v532 = vshrl.u32 %v531, 7
        %v533 = vsub.s32 0, %v532
        %v534 = vrot.slane %v459, %v533
        %536 = vmatprep.subr.mxu0 0.0
        %537 = vmatpush1.msra.mxu0 %v457
        %538 = vmatprep.subr.mxu0 0.0
        %539 = vmatpush1.msra.mxu0 %v456
        %540 = vmatprep.subr.mxu0 0.0
        %541 = vmatpush1.msra.mxu0 %v455
        %542 = vmatprep.subr.mxu0 0.0
        %543 = vmatpush1.msra.mxu0 %v454
        %544 = vmatprep.subr.mxu0 0.0
        %545 = vmatpush1.msra.mxu0 %v453
        %546 = vmatprep.subr.mxu0 0.0
        %547 = vmatpush1.msra.mxu0 %v452
        %548 = vmatprep.subr.mxu0 0.0
        %549 = vmatpush1.msra.mxu0 %v451
        %550 = vmatprep.subr.mxu0 0.0
        %551 = vmatpush1.msra.mxu0 %v450
        %552 = vmatprep.subr.mxu0 0.0
        %553 = vmatpush1.msra.mxu0 %v449
        %554 = vmatprep.subr.mxu0 0.0
        %555 = vmatpush1.msra.mxu0 %v448
        %556 = vmatprep.subr.mxu0 0.0
        %557 = vmatpush1.msra.mxu0 %v447
        %558 = vmatprep.subr.mxu0 0.0
        %559 = vmatpush1.msra.mxu0 %v446
        %560 = vmatprep.subr.mxu0 0.0
        %561 = vmatpush1.msra.mxu0 %v445
        %562 = vmatprep.subr.mxu0 0.0
        %563 = vmatpush1.msra.mxu0 %v444
        %564 = vmatprep.subr.mxu0 0.0
        %565 = vmatpush1.msra.mxu0 %v443
        %566 = vmatprep.subr.mxu0 0.0
        %567 = vmatpush1.msra.mxu0 %v442
        %568 = vmatprep.subr.mxu0 0.0
        %569 = vmatpush2.msra.mxu0 0.0
        %570 = vmatprep.subr.mxu0 0.0
        %571 = vmatpush2.msra.mxu0 0.0
        %572 = vmatprep.subr.mxu0 0.0
        %573 = vmatpush2.msra.mxu0 0.0
        %574 = vmatprep.subr.mxu0 0.0
        %575 = vmatpush2.msra.mxu0 0.0
        %576 = vmatprep.subr.mxu0 0.0
        %577 = vmatpush2.msra.mxu0 0.0
        %578 = vmatprep.subr.mxu0 0.0
        %579 = vmatpush2.msra.mxu0 0.0
        %580 = vmatprep.subr.mxu0 0.0
        %581 = vmatpush2.msra.mxu0 0.0
        %582 = vmatprep.subr.mxu0 0.0
        %583 = vmatpush2.msra.mxu0 0.0
        %584 = vmatprep.subr.mxu0 0.0
        %585 = vmatpush2.msra.mxu0 0.0
        %586 = vmatprep.subr.mxu0 0.0
        %587 = vmatpush2.msra.mxu0 0.0
        %588 = vmatprep.subr.mxu0 0.0
        %589 = vmatpush2.msra.mxu0 0.0
        %590 = vmatprep.subr.mxu0 0.0
        %591 = vmatpush2.msra.mxu0 0.0
        %592 = vmatprep.subr.mxu0 0.0
        %593 = vmatpush2.msra.mxu0 0.0
        %594 = vmatprep.subr.mxu0 0.0
        %595 = vmatpush2.msra.mxu0 0.0
        %596 = vmatprep.subr.mxu0 0.0
        %597 = vmatpush2.msra.mxu0 0.0
        %598 = vmatprep.subr.mxu0 0.0
        %599 = vmatpush2.msra.mxu0 0.0
        %600 = vmatprep.mubr.f32.mxu0 0.0
        %601 = vmatmul.mubr.f32.gmra.mxu0 %v527
        %v602 = vpop.f32.mrf.mxu0
        %v603 = vadd.f32 %v534, %v602
        %v604 = vpop.f32.mrf.mxu0
        %605 = vdwg.mxu0
        %v606 = vmul.f32 %v242, %v603
        %v607 = vadd.f32 %v606, %v423
        %s608 = scalar_lea.vmem [#allocation5], 256
        %v609 = vld [vmem:[%s608] sm:$0xff]
        %v610 = vld [vmem:[%s608 + $0x8] sm:$0xff]
        %v611 = vld [vmem:[%s608 + $0x10] sm:$0xff]
        %v612 = vld [vmem:[%s608 + $0x18] sm:$0xff]
        %v613 = vld [vmem:[%s608 + $0x20] sm:$0xff]
        %v614 = vld [vmem:[%s608 + $0x28] sm:$0xff]
        %v615 = vld [vmem:[%s608 + $0x30] sm:$0xff]
        %v616 = vld [vmem:[%s608 + $0x38] sm:$0xff]
        %v617 = vld [vmem:[%s608 + $0x40] sm:$0xff]
        %v618 = vld [vmem:[%s608 + $0x48] sm:$0xff]
        %v619 = vld [vmem:[%s608 + $0x50] sm:$0xff]
        %v620 = vld [vmem:[%s608 + $0x58] sm:$0xff]
        %v621 = vld [vmem:[%s608 + $0x60] sm:$0xff]
        %v622 = vld [vmem:[%s608 + $0x68] sm:$0xff]
        %v623 = vld [vmem:[%s608 + $0x70] sm:$0xff]
        %v624 = vld [vmem:[%s608 + $0x78] sm:$0xff]
        %s625 = scalar_lea.vmem [#allocation7], 256
        %v626 = vld [vmem:[%s625] sm:$0xff]
        %v627 = vld [vmem:[%s625 + $0x8] sm:$0xff]
        %v628 = vld [vmem:[%s625 + $0x10] sm:$0xff]
        %v629 = vld [vmem:[%s625 + $0x18] sm:$0xff]
        %v630 = vld [vmem:[%s625 + $0x20] sm:$0xff]
        %v631 = vld [vmem:[%s625 + $0x28] sm:$0xff]
        %v632 = vld [vmem:[%s625 + $0x30] sm:$0xff]
        %v633 = vld [vmem:[%s625 + $0x38] sm:$0xff]
        %v634 = vld [vmem:[%s625 + $0x40] sm:$0xff]
        %v635 = vld [vmem:[%s625 + $0x48] sm:$0xff]
        %v636 = vld [vmem:[%s625 + $0x50] sm:$0xff]
        %v637 = vld [vmem:[%s625 + $0x58] sm:$0xff]
        %v638 = vld [vmem:[%s625 + $0x60] sm:$0xff]
        %v639 = vld [vmem:[%s625 + $0x68] sm:$0xff]
        %v640 = vld [vmem:[%s625 + $0x70] sm:$0xff]
        %v641 = vld [vmem:[%s625 + $0x78] sm:$0xff]
        %s642 = scalar_lea.vmem %s3, 2
        %v643 = vld [vmem:[%s642] sm:$0x1]
        %644 = vmatprep.subr.mxu0 0.0
        %645 = vmatpush1.msra.mxu0 %v624
        %646 = vmatprep.subr.mxu0 0.0
        %647 = vmatpush1.msra.mxu0 %v623
        %648 = vmatprep.subr.mxu0 0.0
        %649 = vmatpush1.msra.mxu0 %v622
        %650 = vmatprep.subr.mxu0 0.0
        %651 = vmatpush1.msra.mxu0 %v621
        %652 = vmatprep.subr.mxu0 0.0
        %653 = vmatpush1.msra.mxu0 %v620
        %654 = vmatprep.subr.mxu0 0.0
        %655 = vmatpush1.msra.mxu0 %v619
        %656 = vmatprep.subr.mxu0 0.0
        %657 = vmatpush1.msra.mxu0 %v618
        %658 = vmatprep.subr.mxu0 0.0
        %659 = vmatpush1.msra.mxu0 %v617
        %660 = vmatprep.subr.mxu0 0.0
        %661 = vmatpush1.msra.mxu0 %v616
        %662 = vmatprep.subr.mxu0 0.0
        %663 = vmatpush1.msra.mxu0 %v615
        %664 = vmatprep.subr.mxu0 0.0
        %665 = vmatpush1.msra.mxu0 %v614
        %666 = vmatprep.subr.mxu0 0.0
        %667 = vmatpush1.msra.mxu0 %v613
        %668 = vmatprep.subr.mxu0 0.0
        %669 = vmatpush1.msra.mxu0 %v612
        %670 = vmatprep.subr.mxu0 0.0
        %671 = vmatpush1.msra.mxu0 %v611
        %672 = vmatprep.subr.mxu0 0.0
        %673 = vmatpush1.msra.mxu0 %v610
        %674 = vmatprep.subr.mxu0 0.0
        %675 = vmatpush1.msra.mxu0 %v609
        %676 = vmatprep.subr.mxu0 0.0
        %677 = vmatpush2.msra.mxu0 0.0
        %678 = vmatprep.subr.mxu0 0.0
        %679 = vmatpush2.msra.mxu0 0.0
        %680 = vmatprep.subr.mxu0 0.0
        %681 = vmatpush2.msra.mxu0 0.0
        %682 = vmatprep.subr.mxu0 0.0
        %683 = vmatpush2.msra.mxu0 0.0
        %684 = vmatprep.subr.mxu0 0.0
        %685 = vmatpush2.msra.mxu0 0.0
        %686 = vmatprep.subr.mxu0 0.0
        %687 = vmatpush2.msra.mxu0 0.0
        %688 = vmatprep.subr.mxu0 0.0
        %689 = vmatpush2.msra.mxu0 0.0
        %690 = vmatprep.subr.mxu0 0.0
        %691 = vmatpush2.msra.mxu0 0.0
        %692 = vmatprep.subr.mxu0 0.0
        %693 = vmatpush2.msra.mxu0 0.0
        %694 = vmatprep.subr.mxu0 0.0
        %695 = vmatpush2.msra.mxu0 0.0
        %696 = vmatprep.subr.mxu0 0.0
        %697 = vmatpush2.msra.mxu0 0.0
        %698 = vmatprep.subr.mxu0 0.0
        %699 = vmatpush2.msra.mxu0 0.0
        %700 = vmatprep.subr.mxu0 0.0
        %701 = vmatpush2.msra.mxu0 0.0
        %702 = vmatprep.subr.mxu0 0.0
        %703 = vmatpush2.msra.mxu0 0.0
        %704 = vmatprep.subr.mxu0 0.0
        %705 = vmatpush2.msra.mxu0 0.0
        %706 = vmatprep.subr.mxu0 0.0
        %707 = vmatpush2.msra.mxu0 0.0
        %708 = vmatprep.mubr.f32.mxu0 0.0
        %709 = vmatmul.mubr.f32.gmra.mxu0 %v607
        %v710 = vpop.f32.mrf.mxu0
        %v711 = vadd.f32 0.0, %v710
        %v712 = vpop.f32.mrf.mxu0
        %713 = vdwg.mxu0
        %v715 = vlaneseq
        %v716 = vshrl.u32 %v715, 7
        %v717 = vsub.s32 0, %v716
        %v718 = vrot.slane %v643, %v717
        %720 = vmatprep.subr.mxu0 0.0
        %721 = vmatpush1.msra.mxu0 %v641
        %722 = vmatprep.subr.mxu0 0.0
        %723 = vmatpush1.msra.mxu0 %v640
        %724 = vmatprep.subr.mxu0 0.0
        %725 = vmatpush1.msra.mxu0 %v639
        %726 = vmatprep.subr.mxu0 0.0
        %727 = vmatpush1.msra.mxu0 %v638
        %728 = vmatprep.subr.mxu0 0.0
        %729 = vmatpush1.msra.mxu0 %v637
        %730 = vmatprep.subr.mxu0 0.0
        %731 = vmatpush1.msra.mxu0 %v636
        %732 = vmatprep.subr.mxu0 0.0
        %733 = vmatpush1.msra.mxu0 %v635
        %734 = vmatprep.subr.mxu0 0.0
        %735 = vmatpush1.msra.mxu0 %v634
        %736 = vmatprep.subr.mxu0 0.0
        %737 = vmatpush1.msra.mxu0 %v633
        %738 = vmatprep.subr.mxu0 0.0
        %739 = vmatpush1.msra.mxu0 %v632
        %740 = vmatprep.subr.mxu0 0.0
        %741 = vmatpush1.msra.mxu0 %v631
        %742 = vmatprep.subr.mxu0 0.0
        %743 = vmatpush1.msra.mxu0 %v630
        %744 = vmatprep.subr.mxu0 0.0
        %745 = vmatpush1.msra.mxu0 %v629
        %746 = vmatprep.subr.mxu0 0.0
        %747 = vmatpush1.msra.mxu0 %v628
        %748 = vmatprep.subr.mxu0 0.0
        %749 = vmatpush1.msra.mxu0 %v627
        %750 = vmatprep.subr.mxu0 0.0
        %751 = vmatpush1.msra.mxu0 %v626
        %752 = vmatprep.subr.mxu0 0.0
        %753 = vmatpush2.msra.mxu0 0.0
        %754 = vmatprep.subr.mxu0 0.0
        %755 = vmatpush2.msra.mxu0 0.0
        %756 = vmatprep.subr.mxu0 0.0
        %757 = vmatpush2.msra.mxu0 0.0
        %758 = vmatprep.subr.mxu0 0.0
        %759 = vmatpush2.msra.mxu0 0.0
        %760 = vmatprep.subr.mxu0 0.0
        %761 = vmatpush2.msra.mxu0 0.0
        %762 = vmatprep.subr.mxu0 0.0
        %763 = vmatpush2.msra.mxu0 0.0
        %764 = vmatprep.subr.mxu0 0.0
        %765 = vmatpush2.msra.mxu0 0.0
        %766 = vmatprep.subr.mxu0 0.0
        %767 = vmatpush2.msra.mxu0 0.0
        %768 = vmatprep.subr.mxu0 0.0
        %769 = vmatpush2.msra.mxu0 0.0
        %770 = vmatprep.subr.mxu0 0.0
        %771 = vmatpush2.msra.mxu0 0.0
        %772 = vmatprep.subr.mxu0 0.0
        %773 = vmatpush2.msra.mxu0 0.0
        %774 = vmatprep.subr.mxu0 0.0
        %775 = vmatpush2.msra.mxu0 0.0
        %776 = vmatprep.subr.mxu0 0.0
        %777 = vmatpush2.msra.mxu0 0.0
        %778 = vmatprep.subr.mxu0 0.0
        %779 = vmatpush2.msra.mxu0 0.0
        %780 = vmatprep.subr.mxu0 0.0
        %781 = vmatpush2.msra.mxu0 0.0
        %782 = vmatprep.subr.mxu0 0.0
        %783 = vmatpush2.msra.mxu0 0.0
        %784 = vmatprep.mubr.f32.mxu0 0.0
        %785 = vmatmul.mubr.f32.gmra.mxu0 %v711
        %v786 = vpop.f32.mrf.mxu0
        %v787 = vadd.f32 %v718, %v786
        %v788 = vpop.f32.mrf.mxu0
        %789 = vdwg.mxu0
        %v790 = vmul.f32 %v242, %v787
        %v791 = vadd.f32 %v790, %v607
        %792 = vst [vmem:[%s241] sm:$0xff] %v791
        %s793 = sand.u32 %s119, 1
        %s794 = scalar_lea.sflag [#allocation4], %s793
        %s795 = sand.u32 %s119, 1
        %s796 = smul.addr %s795, 8
        %s797 = scalar_lea.vmem [#allocation8], %s796
        // Predicated region
        $region49: #{tpu_custom_call.1} parent=35 // pred_check
          %p798 = pneg %p129
        $region50: #{tpu_custom_call.1} parent=35 // pred_check_branch
          %800 = sbr.rel (%p798) target = $region52
        $region51: #{tpu_custom_call.1} parent=35 // pred_region
          %s802 = ssub.s32 128, 128
          %803 = vsyncadd %s794, %s802
          %s804 = smul.addr %s22, 128
          %s805 = scalar_lea.hbm %s4, %s804
          %s807 = sshll.u32 %s797, 4
          %s808 = int_to_ptr.vmem [resolvable:$true] %s807
          %810 = dma.vmem_to_hbm [thread:$0]  %s808, 128, %s805, %s794
        $region52: #{tpu_custom_call.1} parent=35 // pred_fallthru
          _
      $region36: #{tpu_custom_call.1} parent=5 // pred_fallthru
        _
      %p811 = scmp.le.s32.totalorder 2, %s17
      // Predicated region
      $region53: #{tpu_custom_call.1} parent=5 // pred_check
        %p812 = pneg %p811
      $region54: #{tpu_custom_call.1} parent=5 // pred_check_branch
        %814 = sbr.rel (%p812) target = $region56
      $region55: #{tpu_custom_call.1} parent=5 // pred_region
        %s815 = ssub.s32 %s17, 2
        // Predicated region
        $region57: #{tpu_custom_call.1} parent=55 // pred_check
          %p816 = pneg %p135
        $region58: #{tpu_custom_call.1} parent=55 // pred_check_branch
          %818 = sbr.rel (%p816) target = $region60
        $region59: #{tpu_custom_call.1} parent=55 // pred_region
          %s819 = sand.u32 %s120, 1
          %s820 = scalar_lea.sflag [#allocation4], %s819
          %s821 = sand.u32 %s120, 1
          %s822 = smul.addr %s821, 8
          %s823 = scalar_lea.vmem [#allocation8], %s822
          %824 = dma.done %s820, 128
        $region60: #{tpu_custom_call.1} parent=55 // pred_fallthru
          _
      $region56: #{tpu_custom_call.1} parent=5 // pred_fallthru
        _
    $region6: #{tpu_custom_call.1} parent=1 // loop_footer
      %s21 = sadd.s32 1, %s17
    $region7: #{tpu_custom_call.1} parent=1 // loop_footer_branch
      %16 = sbr.rel target = $region3
    $region8: #{tpu_custom_call.1} parent=1 // loop_exit
      _
    %825 = vsyncpa [#allocation3], 1
    %s826 = scalar_lea.sflag [#allocation3], 1
    %827 = vsyncpa %s826, 1
    %828 = vsyncpa [#allocation6], 1
    %829 = vsyncpa [#allocation4], 1
    %s830 = scalar_lea.sflag [#allocation4], 1
    %831 = vsyncpa %s830, 1

</llo_original>
